<compile_context>
chip_gen: v7x
topology: tpu7x:2x2x1
jax: 0.10.0
libtpu: 0.0.40
codegen_flags: <defaults>
</compile_context>

<pallas_src>
import jax
import jax.numpy as jnp
from jax.experimental import pallas as pl
from jax.experimental.pallas import tpu as pltpu

C_IN = 3
C1, C2, C3, C4 = 128, 128, 256, 128


def _round_up(a, b):
    return -(-a // b) * b


def _fused_pw_conv_kernel(x_ref,
                          w1_ref, b1_ref,
                          w2_ref, b2_ref,
                          w3_ref, b3_ref,
                          w4_ref, b4_ref,
                          o_ref):
    # x_ref: (1, 3, tp) f32 tile (channels on sublanes, pixels on lanes)
    x = x_ref[0]                                                  # (3, tp)
    w1 = w1_ref[...]                                              # (128, 3)

    # conv1 (K=3): three rank-1 VPU FMAs, full f32, + bias + ReLU
    h = (w1[:, 0:1] * x[0:1, :]
         + w1[:, 1:2] * x[1:2, :]
         + w1[:, 2:3] * x[2:3, :]) + b1_ref[...]                  # (128, tp)
    h = jnp.maximum(h, 0.0)

    # conv2 (bf16 in, f32 acc) + ReLU
    h = jnp.dot(w2_ref[...], h.astype(jnp.bfloat16),
                preferred_element_type=jnp.float32)               # (128, tp)
    h = jnp.maximum(h + b2_ref[...], 0.0)

    # conv3 + ReLU
    h = jnp.dot(w3_ref[...], h.astype(jnp.bfloat16),
                preferred_element_type=jnp.float32)               # (256, tp)
    h = jnp.maximum(h + b3_ref[...], 0.0)

    # conv4 + ReLU
    h = jnp.dot(w4_ref[...], h.astype(jnp.bfloat16),
                preferred_element_type=jnp.float32)               # (128, tp)
    o_ref[0] = jnp.maximum(h + b4_ref[...], 0.0)


def fused_pointwise_convs(x_flat, params, *, tp):
    """x_flat: (N, 3, P_pad) float32 with P_pad % tp == 0.
    Returns (N, 128, P_pad) float32."""
    N, c, P_pad = x_flat.shape
    assert c == C_IN and P_pad % tp == 0

    (w1, b1), (w2, b2), (w3, b3), (w4, b4) = params

    def const_spec(arr):
        # small parameter, resident for every grid step
        return pl.BlockSpec(arr.shape, lambda b, p: (0, 0))

    weight_bytes = sum(int(a.size) * int(a.dtype.itemsize)
                       for pair in params for a in pair)
    flops = 2 * (C_IN * C1 + C1 * C2 + C2 * C3 + C3 * C4) * N * P_pad
    bytes_accessed = (C_IN * 4 + C4 * 4) * N * P_pad + weight_bytes

    return pl.pallas_call(
        _fused_pw_conv_kernel,
        out_shape=jax.ShapeDtypeStruct((N, C4, P_pad), jnp.float32),
        grid_spec=pltpu.PrefetchScalarGridSpec(
            num_scalar_prefetch=0,
            grid=(N, P_pad // tp),
            in_specs=[
                pl.BlockSpec((1, C_IN, tp), lambda b, p: (b, 0, p)),
                const_spec(w1), const_spec(b1),
                const_spec(w2), const_spec(b2),
                const_spec(w3), const_spec(b3),
                const_spec(w4), const_spec(b4),
            ],
            out_specs=pl.BlockSpec((1, C4, tp), lambda b, p: (b, 0, p)),
        ),
        compiler_params=pltpu.CompilerParams(
            dimension_semantics=("parallel", "parallel"),
            vmem_limit_bytes=32 * 1024 * 1024),
        cost_estimate=pl.CostEstimate(
            flops=flops, transcendentals=0, bytes_accessed=bytes_accessed),
    )(x_flat, w1, b1, w2, b2, w3, b3, w4, b4)


def init_params(key):
    """Deterministic init matching PyTorch Conv2d (1x1) fan-in init.

    Weights stored (Cout, Cin) so the kernel computes W @ X (channels-first).
    conv2..conv4 weights are stored bf16 (documented quantization); biases f32
    as (Cout, 1) columns for sublane-aligned broadcast."""
    ks = jax.random.split(key, 8)

    def mk(kw, kb, cin, cout, w_dtype):
        bound = float(cin) ** -0.5
        w = jax.random.uniform(kw, (cout, cin), jnp.float32, -bound, bound)
        b = jax.random.uniform(kb, (cout, 1), jnp.float32, -bound, bound)
        return w.astype(w_dtype), b

    w1, b1 = mk(ks[0], ks[1], C_IN, C1, jnp.float32)
    w2, b2 = mk(ks[2], ks[3], C1, C2, jnp.bfloat16)
    w3, b3 = mk(ks[4], ks[5], C2, C3, jnp.bfloat16)
    w4, b4 = mk(ks[6], ks[7], C3, C4, jnp.bfloat16)
    return ((w1, b1), (w2, b2), (w3, b3), (w4, b4))


def model_forward(x_nchw, params, *, tp_max=2048):
    """x_nchw: (N, 3, H, W) float32 -> (N, 128, ceil(H/2), ceil(W/2)) float32."""
    N, C, H, W = x_nchw.shape
    assert C == C_IN
    # k=1 / stride=2 / pad=0 conv == spatial subsampling then channel matmul
    x_s = x_nchw[:, :, ::2, ::2]                     # (N, 3, Ho, Wo)
    Ho, Wo = x_s.shape[2], x_s.shape[3]
    P = Ho * Wo

    # pick the tile: as few tiles as possible under tp_max, then size the tile
    # to divide P near-evenly (multiple of 128) to minimize pixel padding.
    n_tiles = -(-P // tp_max)
    if N * n_tiles < 2 and P > 256:
        n_tiles = 2                                  # give v7x's 2nd TC work
    tp = _round_up(-(-P // n_tiles), 128)
    P_pad = n_tiles * tp

    x_flat = x_s.reshape(N, C, P)                    # channels-first flatten
    if P_pad != P:
        x_flat = jnp.pad(x_flat, ((0, 0), (0, 0), (0, P_pad - P)))

    y = fused_pointwise_convs(x_flat, params, tp=tp)  # (N, 128, P_pad)
    if P_pad != P:
        y = y[:, :, :P]
    return y.reshape(N, C4, Ho, Wo)                  # already NCHW


def reference_forward(x_nchw, params):
    """Pure-JAX f32 reference (uses the same — bf16-quantized — weights)."""
    (w1, b1), (w2, b2), (w3, b3), (w4, b4) = params
    x_s = x_nchw[:, :, ::2, ::2]
    N, C, Ho, Wo = x_s.shape
    h = x_s.reshape(N, C, Ho * Wo).astype(jnp.float32)

    def layer(w, b, hin):
        y = jnp.einsum('oc,ncp->nop', w.astype(jnp.float32), hin) + b[None]
        return jnp.maximum(y, 0.0)

    h = layer(w1, b1, h)
    h = layer(w2, b2, h)
    h = layer(w3, b3, h)
    h = layer(w4, b4, h)
    return h.reshape(N, C4, Ho, Wo)


if __name__ == "__main__":
    key = jax.random.PRNGKey(0)
    k_param, k_x1, k_x2 = jax.random.split(key, 3)

    params = init_params(k_param)
    fwd = jax.jit(model_forward)

    # small shape consistent with the module: batch=2, 3 channels, 16x16 spatial
    x_small = jax.random.normal(k_x1, (2, 3, 16, 16), jnp.float32)
    y = jax.block_until_ready(fwd(x_small, params))
    y_ref = reference_forward(x_small, params)
    assert y.shape == (2, 128, 8, 8), y.shape
    # layers 2-4 use bf16 matmul inputs (f32 accumulation) -> loose tolerance
    assert jnp.allclose(y, y_ref, atol=5e-2, rtol=5e-2), \
        float(jnp.max(jnp.abs(y - y_ref)))

    # module's own spec shape (1, 3, 128, 128): exercises tp=2048, zero pixel
    # padding, grid=(1, 2)
    x_spec = jax.random.normal(k_x2, (1, 3, 128, 128), jnp.float32)
    y2 = jax.block_until_ready(fwd(x_spec, params))
    y2_ref = reference_forward(x_spec, params)
    assert y2.shape == (1, 128, 64, 64), y2.shape
    assert jnp.allclose(y2, y2_ref, atol=5e-2, rtol=5e-2), \
        float(jnp.max(jnp.abs(y2 - y2_ref)))

    print("KERNEL_OK")
</pallas_src>

<mosaic_0001>
module attributes {stable_mosaic.version = 11 : i64} {
  func.func @_fused_pw_conv_kernel(%arg0: i32, %arg1: i32, %arg2: memref<1x3x128xf32, #tpu.memory_space<vmem>>, %arg3: memref<128x3xf32, #tpu.memory_space<vmem>>, %arg4: memref<128x1xf32, #tpu.memory_space<vmem>>, %arg5: memref<128x128xbf16, #tpu.memory_space<vmem>>, %arg6: memref<128x1xf32, #tpu.memory_space<vmem>>, %arg7: memref<256x128xbf16, #tpu.memory_space<vmem>>, %arg8: memref<256x1xf32, #tpu.memory_space<vmem>>, %arg9: memref<128x256xbf16, #tpu.memory_space<vmem>>, %arg10: memref<128x1xf32, #tpu.memory_space<vmem>>, %arg11: memref<1x128x128xf32, #tpu.memory_space<vmem>>) attributes {dimension_semantics = [#tpu.dimension_semantics<parallel>, #tpu.dimension_semantics<parallel>], iteration_bounds = array<i64: 2, 1>, scalar_prefetch = 0 : i64, scratch_operands = 0 : i64, tpu.core_type = #tpu.core_type<tc>, window_params = [{transform_indices = @transform_0, window_bounds = array<i64: 1, 3, 128>}, {pipeline_mode = #tpu.pipeline_mode<synchronous>, transform_indices = @transform_1, window_bounds = array<i64: 128, 3>}, {pipeline_mode = #tpu.pipeline_mode<synchronous>, transform_indices = @transform_2, window_bounds = array<i64: 128, 1>}, {pipeline_mode = #tpu.pipeline_mode<synchronous>, transform_indices = @transform_3, window_bounds = array<i64: 128, 128>}, {pipeline_mode = #tpu.pipeline_mode<synchronous>, transform_indices = @transform_4, window_bounds = array<i64: 128, 1>}, {pipeline_mode = #tpu.pipeline_mode<synchronous>, transform_indices = @transform_5, window_bounds = array<i64: 256, 128>}, {pipeline_mode = #tpu.pipeline_mode<synchronous>, transform_indices = @transform_6, window_bounds = array<i64: 256, 1>}, {pipeline_mode = #tpu.pipeline_mode<synchronous>, transform_indices = @transform_7, window_bounds = array<i64: 128, 256>}, {pipeline_mode = #tpu.pipeline_mode<synchronous>, transform_indices = @transform_8, window_bounds = array<i64: 128, 1>}, {transform_indices = @transform_9, window_bounds = array<i64: 1, 128, 128>}]} {
    %c0 = arith.constant 0 : index
    %c0_0 = arith.constant 0 : index
    %c0_1 = arith.constant 0 : index
    %0 = vector.load %arg2[%c0, %c0_0, %c0_1] : memref<1x3x128xf32, #tpu.memory_space<vmem>>, vector<1x3x128xf32>
    %1 = vector.shape_cast %0 : vector<1x3x128xf32> to vector<3x128xf32>
    %c0_2 = arith.constant 0 : index
    %c0_3 = arith.constant 0 : index
    %2 = vector.load %arg3[%c0_2, %c0_3] : memref<128x3xf32, #tpu.memory_space<vmem>>, vector<128x3xf32>
    %3 = vector.extract_strided_slice %2 {offsets = [0, 0], sizes = [128, 1], strides = [1, 1]} : vector<128x3xf32> to vector<128x1xf32>
    %4 = vector.extract_strided_slice %1 {offsets = [0, 0], sizes = [1, 128], strides = [1, 1]} : vector<3x128xf32> to vector<1x128xf32>
    %5 = vector.broadcast %3 : vector<128x1xf32> to vector<128x128xf32>
    %6 = vector.broadcast %4 : vector<1x128xf32> to vector<128x128xf32>
    %7 = arith.mulf %5, %6 : vector<128x128xf32>
    %8 = vector.extract_strided_slice %2 {offsets = [0, 1], sizes = [128, 1], strides = [1, 1]} : vector<128x3xf32> to vector<128x1xf32>
    %9 = vector.extract_strided_slice %1 {offsets = [1, 0], sizes = [1, 128], strides = [1, 1]} : vector<3x128xf32> to vector<1x128xf32>
    %10 = vector.broadcast %8 : vector<128x1xf32> to vector<128x128xf32>
    %11 = vector.broadcast %9 : vector<1x128xf32> to vector<128x128xf32>
    %12 = arith.mulf %10, %11 : vector<128x128xf32>
    %13 = arith.addf %7, %12 : vector<128x128xf32>
    %14 = vector.extract_strided_slice %2 {offsets = [0, 2], sizes = [128, 1], strides = [1, 1]} : vector<128x3xf32> to vector<128x1xf32>
    %15 = vector.extract_strided_slice %1 {offsets = [2, 0], sizes = [1, 128], strides = [1, 1]} : vector<3x128xf32> to vector<1x128xf32>
    %16 = vector.broadcast %14 : vector<128x1xf32> to vector<128x128xf32>
    %17 = vector.broadcast %15 : vector<1x128xf32> to vector<128x128xf32>
    %18 = arith.mulf %16, %17 : vector<128x128xf32>
    %19 = arith.addf %13, %18 : vector<128x128xf32>
    %c0_4 = arith.constant 0 : index
    %c0_5 = arith.constant 0 : index
    %20 = vector.load %arg4[%c0_4, %c0_5] : memref<128x1xf32, #tpu.memory_space<vmem>>, vector<128x1xf32>
    %21 = vector.broadcast %20 : vector<128x1xf32> to vector<128x128xf32>
    %22 = arith.addf %19, %21 : vector<128x128xf32>
    %cst = arith.constant 0.000000e+00 : f32
    %23 = vector.broadcast %cst : f32 to vector<128x128xf32>
    %24 = arith.maximumf %22, %23 : vector<128x128xf32>
    %c0_6 = arith.constant 0 : index
    %c0_7 = arith.constant 0 : index
    %25 = vector.load %arg5[%c0_6, %c0_7] : memref<128x128xbf16, #tpu.memory_space<vmem>>, vector<128x128xbf16>
    %26 = arith.truncf %24 : vector<128x128xf32> to vector<128x128xbf16>
    %cst_8 = arith.constant dense<0.000000e+00> : vector<128x128xf32>
    %27 = tpu.matmul %25, %26, %cst_8 {dimension_numbers = #tpu.dot_dimension_numbers<[1], [0], [0], [1], [0, 0, 1, 1], [], []>} : vector<128x128xbf16>, vector<128x128xbf16>, vector<128x128xf32> -> vector<128x128xf32>
    %c0_9 = arith.constant 0 : index
    %c0_10 = arith.constant 0 : index
    %28 = vector.load %arg6[%c0_9, %c0_10] : memref<128x1xf32, #tpu.memory_space<vmem>>, vector<128x1xf32>
    %29 = vector.broadcast %28 : vector<128x1xf32> to vector<128x128xf32>
    %30 = arith.addf %27, %29 : vector<128x128xf32>
    %cst_11 = arith.constant 0.000000e+00 : f32
    %31 = vector.broadcast %cst_11 : f32 to vector<128x128xf32>
    %32 = arith.maximumf %30, %31 : vector<128x128xf32>
    %c0_12 = arith.constant 0 : index
    %c0_13 = arith.constant 0 : index
    %33 = vector.load %arg7[%c0_12, %c0_13] : memref<256x128xbf16, #tpu.memory_space<vmem>>, vector<256x128xbf16>
    %34 = arith.truncf %32 : vector<128x128xf32> to vector<128x128xbf16>
    %cst_14 = arith.constant dense<0.000000e+00> : vector<256x128xf32>
    %35 = tpu.matmul %33, %34, %cst_14 {dimension_numbers = #tpu.dot_dimension_numbers<[1], [0], [0], [1], [0, 0, 1, 1], [], []>} : vector<256x128xbf16>, vector<128x128xbf16>, vector<256x128xf32> -> vector<256x128xf32>
    %c0_15 = arith.constant 0 : index
    %c0_16 = arith.constant 0 : index
    %36 = vector.load %arg8[%c0_15, %c0_16] : memref<256x1xf32, #tpu.memory_space<vmem>>, vector<256x1xf32>
    %37 = vector.broadcast %36 : vector<256x1xf32> to vector<256x128xf32>
    %38 = arith.addf %35, %37 : vector<256x128xf32>
    %cst_17 = arith.constant 0.000000e+00 : f32
    %39 = vector.broadcast %cst_17 : f32 to vector<256x128xf32>
    %40 = arith.maximumf %38, %39 : vector<256x128xf32>
    %c0_18 = arith.constant 0 : index
    %c0_19 = arith.constant 0 : index
    %41 = vector.load %arg9[%c0_18, %c0_19] : memref<128x256xbf16, #tpu.memory_space<vmem>>, vector<128x256xbf16>
    %42 = arith.truncf %40 : vector<256x128xf32> to vector<256x128xbf16>
    %cst_20 = arith.constant dense<0.000000e+00> : vector<128x128xf32>
    %43 = tpu.matmul %41, %42, %cst_20 {dimension_numbers = #tpu.dot_dimension_numbers<[1], [0], [0], [1], [0, 0, 1, 1], [], []>} : vector<128x256xbf16>, vector<256x128xbf16>, vector<128x128xf32> -> vector<128x128xf32>
    %c0_21 = arith.constant 0 : index
    %c0_22 = arith.constant 0 : index
    %44 = vector.load %arg10[%c0_21, %c0_22] : memref<128x1xf32, #tpu.memory_space<vmem>>, vector<128x1xf32>
    %45 = vector.broadcast %44 : vector<128x1xf32> to vector<128x128xf32>
    %46 = arith.addf %43, %45 : vector<128x128xf32>
    %cst_23 = arith.constant 0.000000e+00 : f32
    %47 = vector.broadcast %cst_23 : f32 to vector<128x128xf32>
    %48 = arith.maximumf %46, %47 : vector<128x128xf32>
    %c0_24 = arith.constant 0 : index
    %c0_25 = arith.constant 0 : index
    %c0_26 = arith.constant 0 : index
    %49 = vector.load %arg11[%c0_24, %c0_25, %c0_26] : memref<1x128x128xf32, #tpu.memory_space<vmem>>, vector<1x128x128xf32>
    %50 = vector.shape_cast %49 : vector<1x128x128xf32> to vector<128x128xf32>
    %51 = vector.shape_cast %48 : vector<128x128xf32> to vector<1x128x128xf32>
    tpu.vector_store %arg11[%c0_24, %c0_25, %c0_26], %51 {strides = array<i32>} : memref<1x128x128xf32, #tpu.memory_space<vmem>>, vector<1x128x128xf32>,
    return
  }
  func.func @transform_0(%arg0: i32, %arg1: i32) -> (i32, i32, i32) {
    %c0_i32 = arith.constant 0 : i32
    %c0_i32_0 = arith.constant 0 : i32
    return %arg0, %c0_i32, %arg1 : i32, i32, i32
  }
  func.func @transform_1(%arg0: i32, %arg1: i32) -> (i32, i32) {
    %c0_i32 = arith.constant 0 : i32
    %c0_i32_0 = arith.constant 0 : i32
    %c0_i32_1 = arith.constant 0 : i32
    return %c0_i32, %c0_i32_0 : i32, i32
  }
  func.func @transform_2(%arg0: i32, %arg1: i32) -> (i32, i32) {
    %c0_i32 = arith.constant 0 : i32
    %c0_i32_0 = arith.constant 0 : i32
    %c0_i32_1 = arith.constant 0 : i32
    return %c0_i32, %c0_i32_0 : i32, i32
  }
  func.func @transform_3(%arg0: i32, %arg1: i32) -> (i32, i32) {
    %c0_i32 = arith.constant 0 : i32
    %c0_i32_0 = arith.constant 0 : i32
    %c0_i32_1 = arith.constant 0 : i32
    return %c0_i32, %c0_i32_0 : i32, i32
  }
  func.func @transform_4(%arg0: i32, %arg1: i32) -> (i32, i32) {
    %c0_i32 = arith.constant 0 : i32
    %c0_i32_0 = arith.constant 0 : i32
    %c0_i32_1 = arith.constant 0 : i32
    return %c0_i32, %c0_i32_0 : i32, i32
  }
  func.func @transform_5(%arg0: i32, %arg1: i32) -> (i32, i32) {
    %c0_i32 = arith.constant 0 : i32
    %c0_i32_0 = arith.constant 0 : i32
    %c0_i32_1 = arith.constant 0 : i32
    return %c0_i32, %c0_i32_0 : i32, i32
  }
  func.func @transform_6(%arg0: i32, %arg1: i32) -> (i32, i32) {
    %c0_i32 = arith.constant 0 : i32
    %c0_i32_0 = arith.constant 0 : i32
    %c0_i32_1 = arith.constant 0 : i32
    return %c0_i32, %c0_i32_0 : i32, i32
  }
  func.func @transform_7(%arg0: i32, %arg1: i32) -> (i32, i32) {
    %c0_i32 = arith.constant 0 : i32
    %c0_i32_0 = arith.constant 0 : i32
    %c0_i32_1 = arith.constant 0 : i32
    return %c0_i32, %c0_i32_0 : i32, i32
  }
  func.func @transform_8(%arg0: i32, %arg1: i32) -> (i32, i32) {
    %c0_i32 = arith.constant 0 : i32
    %c0_i32_0 = arith.constant 0 : i32
    %c0_i32_1 = arith.constant 0 : i32
    return %c0_i32, %c0_i32_0 : i32, i32
  }
  func.func @transform_9(%arg0: i32, %arg1: i32) -> (i32, i32, i32) {
    %c0_i32 = arith.constant 0 : i32
    %c0_i32_0 = arith.constant 0 : i32
    return %arg0, %c0_i32, %arg1 : i32, i32, i32
  }
}

</mosaic_0001>

<llo_original>
// kernel: model_forward.1
$region0: #{model_forward.1}
  #allocation0 [shape = 'u32[]', space=smem, size = 0x4, offset = 0x4, fixed_abs, tag = 'smem constant byte address 0x4 - core index']
  #allocation1 [shape = 'u32[144,128]{1,0:T(1,128)}', space=vmem, size = 0x12000, scoped, tag = 'internal scratch']
  %s0 = inlined_call_operand.vmem [shape: f32[2,3,128], index: 0, kind: input, shape index: {}]
  %s1 = inlined_call_operand.vmem [shape: f32[128,3], index: 1, kind: input, shape index: {}]
  %s2 = inlined_call_operand.vmem [shape: f32[128,1], index: 2, kind: input, shape index: {}]
  %s3 = inlined_call_operand.vmem [shape: bf16[128,128], index: 3, kind: input, shape index: {}]
  %s4 = inlined_call_operand.vmem [shape: f32[128,1], index: 4, kind: input, shape index: {}]
  %s5 = inlined_call_operand.vmem [shape: bf16[256,128], index: 5, kind: input, shape index: {}]
  %s6 = inlined_call_operand.vmem [shape: f32[256,1], index: 6, kind: input, shape index: {}]
  %s7 = inlined_call_operand.vmem [shape: bf16[128,256], index: 7, kind: input, shape index: {}]
  %s8 = inlined_call_operand.vmem [shape: f32[128,1], index: 8, kind: input, shape index: {}]
  %s9 = inlined_call_operand.vmem [shape: f32[2,128,128], index: 9, kind: output, shape index: {}]
  %s10 = sld [smem:[#allocation0]]
  $region69: #{model_forward.1} parent=0
    _
  %s12 = ssub.s32 1, %s10
  %s13 = scalar_select 0, %s12, %s10
  loop: start=0, step=1, limit=4
  $region2: #{model_forward.1} parent=0 // loop_pre_header
    _
  $region3: #{model_forward.1} parent=0 // loop_header
    %s15 = sphi 0, %s19
    %p16 = scmp.ge.s32.totalorder %s15, 4
    %s22 = sphi 0, %s34
    %s23 = sphi 0, %s30
    %s24 = sphi 0, %s22
    %s25 = sphi 0, %s23
    %s26 = sphi 0, %s24
    %s27 = sphi 0, %s25
    %s39 = sphi 0, %s41
    %s42 = sphi 0, %s39
    %s43 = sphi 0, %s42
    %s59 = sphi 0, %s43
    %s63 = sphi 0, %s63
    %s65 = sphi 0, %s63
    %s66 = sphi 0, %s65
    %s80 = sphi 0, %s66
    %s84 = sphi 0, %s84
    %s86 = sphi 0, %s84
    %s87 = sphi 0, %s86
    %s101 = sphi 0, %s87
    %s105 = sphi 0, %s105
    %s107 = sphi 0, %s105
    %s108 = sphi 0, %s107
    %s122 = sphi 0, %s108
    %s126 = sphi 0, %s126
    %s128 = sphi 0, %s126
    %s129 = sphi 0, %s128
    %s143 = sphi 0, %s129
    %s147 = sphi 0, %s147
    %s149 = sphi 0, %s147
    %s150 = sphi 0, %s149
    %s164 = sphi 0, %s150
    %s168 = sphi 0, %s168
    %s170 = sphi 0, %s168
    %s171 = sphi 0, %s170
    %s185 = sphi 0, %s171
    %s189 = sphi 0, %s189
    %s191 = sphi 0, %s189
    %s192 = sphi 0, %s191
    %s206 = sphi 0, %s192
    %s210 = sphi 0, %s210
    %s212 = sphi 0, %s210
    %s213 = sphi 0, %s212
    %s227 = sphi 0, %s213
    %s235 = sphi 0, %s237
    %s238 = sphi 0, %s235
    %s239 = sphi 0, %s238
    %s255 = sphi 0, %s239
  $region4: #{model_forward.1} parent=0 // loop_header_branch
    %18 = sbr.rel (%p16) target = $region8
  $region5: #{model_forward.1} parent=0 // loop_body
    %s20 = ssub.s32 %s15, 1
    %s21 = ssub.s32 %s15, 2
    %s28 = sadd.s32 1, %s23
    %p29 = scmp.ge.s32.totalorder %s28, 1
    %s30 = scalar_select %p29, 0, %s28
    %s31 = sadd.s32 1, %s22
    %s32 = scalar_select %p29, %s31, %s22
    %p33 = scmp.ge.s32.totalorder %s32, 2
    %s34 = scalar_select %p33, 0, %s32
    %s35 = ssub.s32 %s22, %s34
    %s36 = ssub.s32 %s23, %s30
    %s37 = sor.u32 %s35, %s36
    %p38 = scmp.eq.s32.totalorder %s37, 0
    %s40 = sadd.s32 %s39, 1
    %s41 = scalar_select %p38, %s39, %s40
    %p44 = pneg %p38
    %p45 = scmp.eq.s32.totalorder %s15, 1
    %p46 = por %p44, %p45
    %p47 = scmp.ne.s32.totalorder %s39, %s42
    %p48 = scmp.eq.s32.totalorder %s15, 0
    %p49 = por %p47, %p48
    %p50 = scmp.ne.s32.totalorder %s39, %s42
    %p51 = scmp.eq.s32.totalorder %s20, 1
    %p52 = por %p50, %p51
    %p53 = scmp.ne.s32.totalorder %s42, %s43
    %p54 = scmp.eq.s32.totalorder %s20, 0
    %p55 = por %p53, %p54
    %p56 = scmp.ne.s32.totalorder %s42, %s43
    %p57 = scmp.eq.s32.totalorder %s21, 1
    %p58 = por %p56, %p57
    %p60 = scmp.ne.s32.totalorder %s43, %s59
    %p61 = scmp.eq.s32.totalorder %s21, 0
    %p62 = por %p60, %p61
    %s64 = sadd.s32 %s63, 1
    %p67 = scmp.eq.s32.totalorder %s15, 1
    %p68 = scmp.ne.s32.totalorder %s63, %s65
    %p69 = scmp.eq.s32.totalorder %s15, 0
    %p70 = por %p68, %p69
    %p71 = scmp.ne.s32.totalorder %s63, %s65
    %p72 = scmp.eq.s32.totalorder %s20, 1
    %p73 = por %p71, %p72
    %p74 = scmp.ne.s32.totalorder %s65, %s66
    %p75 = scmp.eq.s32.totalorder %s20, 0
    %p76 = por %p74, %p75
    %p77 = scmp.ne.s32.totalorder %s65, %s66
    %p78 = scmp.eq.s32.totalorder %s21, 1
    %p79 = por %p77, %p78
    %p81 = scmp.ne.s32.totalorder %s66, %s80
    %p82 = scmp.eq.s32.totalorder %s21, 0
    %p83 = por %p81, %p82
    %s85 = sadd.s32 %s84, 1
    %p88 = scmp.eq.s32.totalorder %s15, 1
    %p89 = scmp.ne.s32.totalorder %s84, %s86
    %p90 = scmp.eq.s32.totalorder %s15, 0
    %p91 = por %p89, %p90
    %p92 = scmp.ne.s32.totalorder %s84, %s86
    %p93 = scmp.eq.s32.totalorder %s20, 1
    %p94 = por %p92, %p93
    %p95 = scmp.ne.s32.totalorder %s86, %s87
    %p96 = scmp.eq.s32.totalorder %s20, 0
    %p97 = por %p95, %p96
    %p98 = scmp.ne.s32.totalorder %s86, %s87
    %p99 = scmp.eq.s32.totalorder %s21, 1
    %p100 = por %p98, %p99
    %p102 = scmp.ne.s32.totalorder %s87, %s101
    %p103 = scmp.eq.s32.totalorder %s21, 0
    %p104 = por %p102, %p103
    %s106 = sadd.s32 %s105, 1
    %p109 = scmp.eq.s32.totalorder %s15, 1
    %p110 = scmp.ne.s32.totalorder %s105, %s107
    %p111 = scmp.eq.s32.totalorder %s15, 0
    %p112 = por %p110, %p111
    %p113 = scmp.ne.s32.totalorder %s105, %s107
    %p114 = scmp.eq.s32.totalorder %s20, 1
    %p115 = por %p113, %p114
    %p116 = scmp.ne.s32.totalorder %s107, %s108
    %p117 = scmp.eq.s32.totalorder %s20, 0
    %p118 = por %p116, %p117
    %p119 = scmp.ne.s32.totalorder %s107, %s108
    %p120 = scmp.eq.s32.totalorder %s21, 1
    %p121 = por %p119, %p120
    %p123 = scmp.ne.s32.totalorder %s108, %s122
    %p124 = scmp.eq.s32.totalorder %s21, 0
    %p125 = por %p123, %p124
    %s127 = sadd.s32 %s126, 1
    %p130 = scmp.eq.s32.totalorder %s15, 1
    %p131 = scmp.ne.s32.totalorder %s126, %s128
    %p132 = scmp.eq.s32.totalorder %s15, 0
    %p133 = por %p131, %p132
    %p134 = scmp.ne.s32.totalorder %s126, %s128
    %p135 = scmp.eq.s32.totalorder %s20, 1
    %p136 = por %p134, %p135
    %p137 = scmp.ne.s32.totalorder %s128, %s129
    %p138 = scmp.eq.s32.totalorder %s20, 0
    %p139 = por %p137, %p138
    %p140 = scmp.ne.s32.totalorder %s128, %s129
    %p141 = scmp.eq.s32.totalorder %s21, 1
    %p142 = por %p140, %p141
    %p144 = scmp.ne.s32.totalorder %s129, %s143
    %p145 = scmp.eq.s32.totalorder %s21, 0
    %p146 = por %p144, %p145
    %s148 = sadd.s32 %s147, 1
    %p151 = scmp.eq.s32.totalorder %s15, 1
    %p152 = scmp.ne.s32.totalorder %s147, %s149
    %p153 = scmp.eq.s32.totalorder %s15, 0
    %p154 = por %p152, %p153
    %p155 = scmp.ne.s32.totalorder %s147, %s149
    %p156 = scmp.eq.s32.totalorder %s20, 1
    %p157 = por %p155, %p156
    %p158 = scmp.ne.s32.totalorder %s149, %s150
    %p159 = scmp.eq.s32.totalorder %s20, 0
    %p160 = por %p158, %p159
    %p161 = scmp.ne.s32.totalorder %s149, %s150
    %p162 = scmp.eq.s32.totalorder %s21, 1
    %p163 = por %p161, %p162
    %p165 = scmp.ne.s32.totalorder %s150, %s164
    %p166 = scmp.eq.s32.totalorder %s21, 0
    %p167 = por %p165, %p166
    %s169 = sadd.s32 %s168, 1
    %p172 = scmp.eq.s32.totalorder %s15, 1
    %p173 = scmp.ne.s32.totalorder %s168, %s170
    %p174 = scmp.eq.s32.totalorder %s15, 0
    %p175 = por %p173, %p174
    %p176 = scmp.ne.s32.totalorder %s168, %s170
    %p177 = scmp.eq.s32.totalorder %s20, 1
    %p178 = por %p176, %p177
    %p179 = scmp.ne.s32.totalorder %s170, %s171
    %p180 = scmp.eq.s32.totalorder %s20, 0
    %p181 = por %p179, %p180
    %p182 = scmp.ne.s32.totalorder %s170, %s171
    %p183 = scmp.eq.s32.totalorder %s21, 1
    %p184 = por %p182, %p183
    %p186 = scmp.ne.s32.totalorder %s171, %s185
    %p187 = scmp.eq.s32.totalorder %s21, 0
    %p188 = por %p186, %p187
    %s190 = sadd.s32 %s189, 1
    %p193 = scmp.eq.s32.totalorder %s15, 1
    %p194 = scmp.ne.s32.totalorder %s189, %s191
    %p195 = scmp.eq.s32.totalorder %s15, 0
    %p196 = por %p194, %p195
    %p197 = scmp.ne.s32.totalorder %s189, %s191
    %p198 = scmp.eq.s32.totalorder %s20, 1
    %p199 = por %p197, %p198
    %p200 = scmp.ne.s32.totalorder %s191, %s192
    %p201 = scmp.eq.s32.totalorder %s20, 0
    %p202 = por %p200, %p201
    %p203 = scmp.ne.s32.totalorder %s191, %s192
    %p204 = scmp.eq.s32.totalorder %s21, 1
    %p205 = por %p203, %p204
    %p207 = scmp.ne.s32.totalorder %s192, %s206
    %p208 = scmp.eq.s32.totalorder %s21, 0
    %p209 = por %p207, %p208
    %s211 = sadd.s32 %s210, 1
    %p214 = scmp.eq.s32.totalorder %s15, 1
    %p215 = scmp.ne.s32.totalorder %s210, %s212
    %p216 = scmp.eq.s32.totalorder %s15, 0
    %p217 = por %p215, %p216
    %p218 = scmp.ne.s32.totalorder %s210, %s212
    %p219 = scmp.eq.s32.totalorder %s20, 1
    %p220 = por %p218, %p219
    %p221 = scmp.ne.s32.totalorder %s212, %s213
    %p222 = scmp.eq.s32.totalorder %s20, 0
    %p223 = por %p221, %p222
    %p224 = scmp.ne.s32.totalorder %s212, %s213
    %p225 = scmp.eq.s32.totalorder %s21, 1
    %p226 = por %p224, %p225
    %p228 = scmp.ne.s32.totalorder %s213, %s227
    %p229 = scmp.eq.s32.totalorder %s21, 0
    %p230 = por %p228, %p229
    %s231 = ssub.s32 %s22, %s34
    %s232 = ssub.s32 %s23, %s30
    %s233 = sor.u32 %s231, %s232
    %p234 = scmp.eq.s32.totalorder %s233, 0
    %s236 = sadd.s32 %s235, 1
    %s237 = scalar_select %p234, %s235, %s236
    %p240 = pneg %p234
    %p241 = scmp.eq.s32.totalorder %s15, 1
    %p242 = por %p240, %p241
    %p243 = scmp.ne.s32.totalorder %s235, %s238
    %p244 = scmp.eq.s32.totalorder %s15, 0
    %p245 = por %p243, %p244
    %p246 = scmp.ne.s32.totalorder %s235, %s238
    %p247 = scmp.eq.s32.totalorder %s20, 1
    %p248 = por %p246, %p247
    %p249 = scmp.ne.s32.totalorder %s238, %s239
    %p250 = scmp.eq.s32.totalorder %s20, 0
    %p251 = por %p249, %p250
    %p252 = scmp.ne.s32.totalorder %s238, %s239
    %p253 = scmp.eq.s32.totalorder %s21, 1
    %p254 = por %p252, %p253
    %p256 = scmp.ne.s32.totalorder %s239, %s255
    %p257 = scmp.eq.s32.totalorder %s21, 0
    %p258 = por %p256, %p257
    %p259 = scmp.le.s32.totalorder 1, %s15
    %p260 = scmp.lt.s32.totalorder %s15, 3
    %p261 = pnand %p259, %p260
    %p262 = pneg %p261
    // Predicated region
    $region9: #{model_forward.1} parent=5 // pred_check
      _
    $region10: #{model_forward.1} parent=5 // pred_check_branch
      %264 = sbr.rel (%p261) target = $region12
    $region11: #{model_forward.1} parent=5 // pred_region
      %s265 = ssub.s32 %s15, 1
      // Predicated region
      $region13: #{model_forward.1} parent=11 // pred_check
        %p266 = pneg %p76
      $region14: #{model_forward.1} parent=11 // pred_check_branch
        %268 = sbr.rel (%p266) target = $region16
      $region15: #{model_forward.1} parent=11 // pred_region
        _
      $region16: #{model_forward.1} parent=11 // pred_fallthru
        _
      // Predicated region
      $region17: #{model_forward.1} parent=11 // pred_check
        %p269 = pneg %p97
      $region18: #{model_forward.1} parent=11 // pred_check_branch
        %271 = sbr.rel (%p269) target = $region20
      $region19: #{model_forward.1} parent=11 // pred_region
        _
      $region20: #{model_forward.1} parent=11 // pred_fallthru
        _
      // Predicated region
      $region21: #{model_forward.1} parent=11 // pred_check
        %p272 = pneg %p118
      $region22: #{model_forward.1} parent=11 // pred_check_branch
        %274 = sbr.rel (%p272) target = $region24
      $region23: #{model_forward.1} parent=11 // pred_region
        _
      $region24: #{model_forward.1} parent=11 // pred_fallthru
        _
      // Predicated region
      $region25: #{model_forward.1} parent=11 // pred_check
        %p275 = pneg %p139
      $region26: #{model_forward.1} parent=11 // pred_check_branch
        %277 = sbr.rel (%p275) target = $region28
      $region27: #{model_forward.1} parent=11 // pred_region
        _
      $region28: #{model_forward.1} parent=11 // pred_fallthru
        _
      // Predicated region
      $region29: #{model_forward.1} parent=11 // pred_check
        %p278 = pneg %p160
      $region30: #{model_forward.1} parent=11 // pred_check_branch
        %280 = sbr.rel (%p278) target = $region32
      $region31: #{model_forward.1} parent=11 // pred_region
        _
      $region32: #{model_forward.1} parent=11 // pred_fallthru
        _
      // Predicated region
      $region33: #{model_forward.1} parent=11 // pred_check
        %p281 = pneg %p181
      $region34: #{model_forward.1} parent=11 // pred_check_branch
        %283 = sbr.rel (%p281) target = $region36
      $region35: #{model_forward.1} parent=11 // pred_region
        _
      $region36: #{model_forward.1} parent=11 // pred_fallthru
        _
      // Predicated region
      $region37: #{model_forward.1} parent=11 // pred_check
        %p284 = pneg %p202
      $region38: #{model_forward.1} parent=11 // pred_check_branch
        %286 = sbr.rel (%p284) target = $region40
      $region39: #{model_forward.1} parent=11 // pred_region
        _
      $region40: #{model_forward.1} parent=11 // pred_fallthru
        _
      // Predicated region
      $region41: #{model_forward.1} parent=11 // pred_check
        %p287 = pneg %p223
      $region42: #{model_forward.1} parent=11 // pred_check_branch
        %289 = sbr.rel (%p287) target = $region44
      $region43: #{model_forward.1} parent=11 // pred_region
        _
      $region44: #{model_forward.1} parent=11 // pred_fallthru
        _
    $region12: #{model_forward.1} parent=5 // pred_fallthru
      _
    %p290 = scmp.lt.s32.totalorder %s15, 2
    // Predicated region
    $region45: #{model_forward.1} parent=5 // pred_check
      %p291 = pneg %p290
    $region46: #{model_forward.1} parent=5 // pred_check_branch
      %293 = sbr.rel (%p291) target = $region48
    $region47: #{model_forward.1} parent=5 // pred_region
      // Predicated region
      $region49: #{model_forward.1} parent=47 // pred_check
        %p294 = pneg %p49
      $region50: #{model_forward.1} parent=47 // pred_check_branch
        %296 = sbr.rel (%p294) target = $region52
      $region51: #{model_forward.1} parent=47 // pred_region
        %p297 = scmp.lt.s32.totalorder %s22, 1
        %s298 = scalar_select %p297, %s22, 1
        %p299 = scmp.lt.s32.totalorder %s23, 0
        %s300 = scalar_select %p299, %s23, 0
        %s301 = sadd.s32 %s300, %s298
        %s302 = smul.addr %s301, 4
        %s303 = scalar_lea.vmem %s0, %s302
      $region52: #{model_forward.1} parent=47 // pred_fallthru
        _
    $region48: #{model_forward.1} parent=5 // pred_fallthru
      _
    %p304 = scmp.le.s32.totalorder 1, %s15
    %p305 = scmp.lt.s32.totalorder %s15, 3
    %p306 = pnand %p304, %p305
    %p307 = pneg %p306
    // Predicated region
    $region53: #{model_forward.1} parent=5 // pred_check
      _
    $region54: #{model_forward.1} parent=5 // pred_check_branch
      %309 = sbr.rel (%p306) target = $region56
    $region55: #{model_forward.1} parent=5 // pred_region
      %s310 = ssub.s32 %s15, 1
      %p311 = scmp.lt.s32.totalorder %s24, 1
      %s312 = scalar_select %p311, %s24, 1
      %p313 = scmp.lt.s32.totalorder %s25, 0
      %s314 = scalar_select %p313, %s25, 0
      %s315 = sadd.s32 %s314, %s312
      %s316 = smul.addr %s315, 4
      %s317 = scalar_lea.vmem %s0, %s316
      %p318 = pneg %p55
      %p319 = pneg %p52
      %p320 = pneg %p76
      %p321 = pneg %p73
      %p322 = pneg %p97
      %p323 = pneg %p94
      %p324 = pneg %p118
      %p325 = pneg %p115
      %p326 = pneg %p139
      %p327 = pneg %p136
      %p328 = pneg %p160
      %p329 = pneg %p157
      %p330 = pneg %p181
      %p331 = pneg %p178
      %p332 = pneg %p202
      %p333 = pneg %p199
      %p334 = pneg %p223
      %p335 = pneg %p220
      %p336 = pneg %p251
      %p337 = pneg %p248
      %p338 = scmp.lt.s32.totalorder %s24, 1
      %s339 = scalar_select %p338, %s24, 1
      %p340 = scmp.lt.s32.totalorder %s25, 0
      %s341 = scalar_select %p340, %s25, 0
      %s342 = smul.addr %s339, 16
      %s343 = sadd.s32 %s341, %s342
      %s344 = smul.addr %s343, 8
      %s345 = scalar_lea.vmem %s9, %s344
      %p346 = scmp.lt.s32.totalorder %s24, 1
      %s347 = scalar_select %p346, %s24, 1
      %p348 = scmp.lt.s32.totalorder %s25, 0
      %s349 = scalar_select %p348, %s25, 0
      %s350 = sadd.s32 %s349, %s347
      %s351 = smul.addr %s350, 4
      %s352 = scalar_lea.vmem %s0, %s351
      %p353 = scmp.lt.s32.totalorder %s24, 1
      %s354 = scalar_select %p353, %s24, 1
      %p355 = scmp.lt.s32.totalorder %s25, 0
      %s356 = scalar_select %p355, %s25, 0
      %s357 = smul.addr %s354, 16
      %s358 = sadd.s32 %s356, %s357
      %s359 = smul.addr %s358, 8
      %s360 = scalar_lea.vmem %s9, %s359
      %v362 = vld [vmem:[%s352] sm:$0x7]
      %v363 = vld [vmem:[%s1] sm:$0xff]
      %v364 = vld [vmem:[%s1 + $0x8] sm:$0xff]
      %v365 = vld [vmem:[%s1 + $0x10] sm:$0xff]
      %v366 = vld [vmem:[%s1 + $0x18] sm:$0xff]
      %v367 = vld [vmem:[%s1 + $0x20] sm:$0xff]
      %v368 = vld [vmem:[%s1 + $0x28] sm:$0xff]
      %v369 = vld [vmem:[%s1 + $0x30] sm:$0xff]
      %v370 = vld [vmem:[%s1 + $0x38] sm:$0xff]
      %v371 = vld [vmem:[%s1 + $0x40] sm:$0xff]
      %v372 = vld [vmem:[%s1 + $0x48] sm:$0xff]
      %v373 = vld [vmem:[%s1 + $0x50] sm:$0xff]
      %v374 = vld [vmem:[%s1 + $0x58] sm:$0xff]
      %v375 = vld [vmem:[%s1 + $0x60] sm:$0xff]
      %v376 = vld [vmem:[%s1 + $0x68] sm:$0xff]
      %v377 = vld [vmem:[%s1 + $0x70] sm:$0xff]
      %v378 = vld [vmem:[%s1 + $0x78] sm:$0xff]
      %380 = vset.pattern.permute.xlu0 0
      %381 = vperm.xlu0 %380, %v363
      %v382 = vpop.permute.xlu0 %381
      %385 = vset.pattern.permute.xlu0 0
      %386 = vperm.xlu0 %385, %v364
      %v387 = vpop.permute.xlu0 %386
      %390 = vset.pattern.permute.xlu0 0
      %391 = vperm.xlu0 %390, %v365
      %v392 = vpop.permute.xlu0 %391
      %395 = vset.pattern.permute.xlu0 0
      %396 = vperm.xlu0 %395, %v366
      %v397 = vpop.permute.xlu0 %396
      %400 = vset.pattern.permute.xlu0 0
      %401 = vperm.xlu0 %400, %v367
      %v402 = vpop.permute.xlu0 %401
      %405 = vset.pattern.permute.xlu0 0
      %406 = vperm.xlu0 %405, %v368
      %v407 = vpop.permute.xlu0 %406
      %410 = vset.pattern.permute.xlu0 0
      %411 = vperm.xlu0 %410, %v369
      %v412 = vpop.permute.xlu0 %411
      %415 = vset.pattern.permute.xlu0 0
      %416 = vperm.xlu0 %415, %v370
      %v417 = vpop.permute.xlu0 %416
      %420 = vset.pattern.permute.xlu0 0
      %421 = vperm.xlu0 %420, %v371
      %v422 = vpop.permute.xlu0 %421
      %425 = vset.pattern.permute.xlu0 0
      %426 = vperm.xlu0 %425, %v372
      %v427 = vpop.permute.xlu0 %426
      %430 = vset.pattern.permute.xlu0 0
      %431 = vperm.xlu0 %430, %v373
      %v432 = vpop.permute.xlu0 %431
      %435 = vset.pattern.permute.xlu0 0
      %436 = vperm.xlu0 %435, %v374
      %v437 = vpop.permute.xlu0 %436
      %440 = vset.pattern.permute.xlu0 0
      %441 = vperm.xlu0 %440, %v375
      %v442 = vpop.permute.xlu0 %441
      %445 = vset.pattern.permute.xlu0 0
      %446 = vperm.xlu0 %445, %v376
      %v447 = vpop.permute.xlu0 %446
      %450 = vset.pattern.permute.xlu0 0
      %451 = vperm.xlu0 %450, %v377
      %v452 = vpop.permute.xlu0 %451
      %455 = vset.pattern.permute.xlu0 0
      %456 = vperm.xlu0 %455, %v378
      %v457 = vpop.permute.xlu0 %456
      %v459 = vlaneseq
      %v460 = vshrl.u32 %v459, 7
      %v461 = vsub.s32 0, %v460
      %v462 = vrot.slane %v362, %v461
      %v463 = vmul.f32 %v382, %v462
      %v464 = vmul.f32 %v387, %v462
      %v465 = vmul.f32 %v392, %v462
      %v466 = vmul.f32 %v397, %v462
      %v467 = vmul.f32 %v402, %v462
      %v468 = vmul.f32 %v407, %v462
      %v469 = vmul.f32 %v412, %v462
      %v470 = vmul.f32 %v417, %v462
      %v471 = vmul.f32 %v422, %v462
      %v472 = vmul.f32 %v427, %v462
      %v473 = vmul.f32 %v432, %v462
      %v474 = vmul.f32 %v437, %v462
      %v475 = vmul.f32 %v442, %v462
      %v476 = vmul.f32 %v447, %v462
      %v477 = vmul.f32 %v452, %v462
      %v478 = vmul.f32 %v457, %v462
      %479 = vset.pattern.permute.xlu0 1
      %480 = vperm.xlu0 %479, %v363
      %v481 = vpop.permute.xlu0 %480
      %483 = vset.pattern.permute.xlu0 1
      %484 = vperm.xlu0 %483, %v364
      %v485 = vpop.permute.xlu0 %484
      %487 = vset.pattern.permute.xlu0 1
      %488 = vperm.xlu0 %487, %v365
      %v489 = vpop.permute.xlu0 %488
      %491 = vset.pattern.permute.xlu0 1
      %492 = vperm.xlu0 %491, %v366
      %v493 = vpop.permute.xlu0 %492
      %495 = vset.pattern.permute.xlu0 1
      %496 = vperm.xlu0 %495, %v367
      %v497 = vpop.permute.xlu0 %496
      %499 = vset.pattern.permute.xlu0 1
      %500 = vperm.xlu0 %499, %v368
      %v501 = vpop.permute.xlu0 %500
      %503 = vset.pattern.permute.xlu0 1
      %504 = vperm.xlu0 %503, %v369
      %v505 = vpop.permute.xlu0 %504
      %507 = vset.pattern.permute.xlu0 1
      %508 = vperm.xlu0 %507, %v370
      %v509 = vpop.permute.xlu0 %508
      %511 = vset.pattern.permute.xlu0 1
      %512 = vperm.xlu0 %511, %v371
      %v513 = vpop.permute.xlu0 %512
      %515 = vset.pattern.permute.xlu0 1
      %516 = vperm.xlu0 %515, %v372
      %v517 = vpop.permute.xlu0 %516
      %519 = vset.pattern.permute.xlu0 1
      %520 = vperm.xlu0 %519, %v373
      %v521 = vpop.permute.xlu0 %520
      %523 = vset.pattern.permute.xlu0 1
      %524 = vperm.xlu0 %523, %v374
      %v525 = vpop.permute.xlu0 %524
      %527 = vset.pattern.permute.xlu0 1
      %528 = vperm.xlu0 %527, %v375
      %v529 = vpop.permute.xlu0 %528
      %531 = vset.pattern.permute.xlu0 1
      %532 = vperm.xlu0 %531, %v376
      %v533 = vpop.permute.xlu0 %532
      %535 = vset.pattern.permute.xlu0 1
      %536 = vperm.xlu0 %535, %v377
      %v537 = vpop.permute.xlu0 %536
      %539 = vset.pattern.permute.xlu0 1
      %540 = vperm.xlu0 %539, %v378
      %v541 = vpop.permute.xlu0 %540
      %v543 = vlaneseq
      %v544 = vshrl.u32 %v543, 7
      %v545 = vsub.s32 1, %v544
      %v546 = vrot.slane %v362, %v545
      %v547 = vmul.f32 %v481, %v546
      %v548 = vmul.f32 %v485, %v546
      %v549 = vmul.f32 %v489, %v546
      %v550 = vmul.f32 %v493, %v546
      %v551 = vmul.f32 %v497, %v546
      %v552 = vmul.f32 %v501, %v546
      %v553 = vmul.f32 %v505, %v546
      %v554 = vmul.f32 %v509, %v546
      %v555 = vmul.f32 %v513, %v546
      %v556 = vmul.f32 %v517, %v546
      %v557 = vmul.f32 %v521, %v546
      %v558 = vmul.f32 %v525, %v546
      %v559 = vmul.f32 %v529, %v546
      %v560 = vmul.f32 %v533, %v546
      %v561 = vmul.f32 %v537, %v546
      %v562 = vmul.f32 %v541, %v546
      %v563 = vadd.f32 %v463, %v547
      %v564 = vadd.f32 %v464, %v548
      %v565 = vadd.f32 %v465, %v549
      %v566 = vadd.f32 %v466, %v550
      %v567 = vadd.f32 %v467, %v551
      %v568 = vadd.f32 %v468, %v552
      %v569 = vadd.f32 %v469, %v553
      %v570 = vadd.f32 %v470, %v554
      %v571 = vadd.f32 %v471, %v555
      %v572 = vadd.f32 %v472, %v556
      %v573 = vadd.f32 %v473, %v557
      %v574 = vadd.f32 %v474, %v558
      %v575 = vadd.f32 %v475, %v559
      %v576 = vadd.f32 %v476, %v560
      %v577 = vadd.f32 %v477, %v561
      %v578 = vadd.f32 %v478, %v562
      %579 = vset.pattern.permute.xlu0 2
      %580 = vperm.xlu0 %579, %v363
      %v581 = vpop.permute.xlu0 %580
      %583 = vset.pattern.permute.xlu0 2
      %584 = vperm.xlu0 %583, %v364
      %v585 = vpop.permute.xlu0 %584
      %587 = vset.pattern.permute.xlu0 2
      %588 = vperm.xlu0 %587, %v365
      %v589 = vpop.permute.xlu0 %588
      %591 = vset.pattern.permute.xlu0 2
      %592 = vperm.xlu0 %591, %v366
      %v593 = vpop.permute.xlu0 %592
      %595 = vset.pattern.permute.xlu0 2
      %596 = vperm.xlu0 %595, %v367
      %v597 = vpop.permute.xlu0 %596
      %599 = vset.pattern.permute.xlu0 2
      %600 = vperm.xlu0 %599, %v368
      %v601 = vpop.permute.xlu0 %600
      %603 = vset.pattern.permute.xlu0 2
      %604 = vperm.xlu0 %603, %v369
      %v605 = vpop.permute.xlu0 %604
      %607 = vset.pattern.permute.xlu0 2
      %608 = vperm.xlu0 %607, %v370
      %v609 = vpop.permute.xlu0 %608
      %611 = vset.pattern.permute.xlu0 2
      %612 = vperm.xlu0 %611, %v371
      %v613 = vpop.permute.xlu0 %612
      %615 = vset.pattern.permute.xlu0 2
      %616 = vperm.xlu0 %615, %v372
      %v617 = vpop.permute.xlu0 %616
      %619 = vset.pattern.permute.xlu0 2
      %620 = vperm.xlu0 %619, %v373
      %v621 = vpop.permute.xlu0 %620
      %623 = vset.pattern.permute.xlu0 2
      %624 = vperm.xlu0 %623, %v374
      %v625 = vpop.permute.xlu0 %624
      %627 = vset.pattern.permute.xlu0 2
      %628 = vperm.xlu0 %627, %v375
      %v629 = vpop.permute.xlu0 %628
      %631 = vset.pattern.permute.xlu0 2
      %632 = vperm.xlu0 %631, %v376
      %v633 = vpop.permute.xlu0 %632
      %635 = vset.pattern.permute.xlu0 2
      %636 = vperm.xlu0 %635, %v377
      %v637 = vpop.permute.xlu0 %636
      %639 = vset.pattern.permute.xlu0 2
      %640 = vperm.xlu0 %639, %v378
      %v641 = vpop.permute.xlu0 %640
      %v643 = vlaneseq
      %v644 = vshrl.u32 %v643, 7
      %v645 = vsub.s32 2, %v644
      %v646 = vrot.slane %v362, %v645
      %v647 = vmul.f32 %v581, %v646
      %v648 = vmul.f32 %v585, %v646
      %v649 = vmul.f32 %v589, %v646
      %v650 = vmul.f32 %v593, %v646
      %v651 = vmul.f32 %v597, %v646
      %v652 = vmul.f32 %v601, %v646
      %v653 = vmul.f32 %v605, %v646
      %v654 = vmul.f32 %v609, %v646
      %v655 = vmul.f32 %v613, %v646
      %v656 = vmul.f32 %v617, %v646
      %v657 = vmul.f32 %v621, %v646
      %v658 = vmul.f32 %v625, %v646
      %v659 = vmul.f32 %v629, %v646
      %v660 = vmul.f32 %v633, %v646
      %v661 = vmul.f32 %v637, %v646
      %v662 = vmul.f32 %v641, %v646
      %v663 = vadd.f32 %v563, %v647
      %v664 = vadd.f32 %v564, %v648
      %v665 = vadd.f32 %v565, %v649
      %v666 = vadd.f32 %v566, %v650
      %v667 = vadd.f32 %v567, %v651
      %v668 = vadd.f32 %v568, %v652
      %v669 = vadd.f32 %v569, %v653
      %v670 = vadd.f32 %v570, %v654
      %v671 = vadd.f32 %v571, %v655
      %v672 = vadd.f32 %v572, %v656
      %v673 = vadd.f32 %v573, %v657
      %v674 = vadd.f32 %v574, %v658
      %v675 = vadd.f32 %v575, %v659
      %v676 = vadd.f32 %v576, %v660
      %v677 = vadd.f32 %v577, %v661
      %v678 = vadd.f32 %v578, %v662
      %v679 = vld [vmem:[%s2] sm:$0xff]
      %v680 = vld [vmem:[%s2 + $0x8] sm:$0xff]
      %v681 = vld [vmem:[%s2 + $0x10] sm:$0xff]
      %v682 = vld [vmem:[%s2 + $0x18] sm:$0xff]
      %v683 = vld [vmem:[%s2 + $0x20] sm:$0xff]
      %v684 = vld [vmem:[%s2 + $0x28] sm:$0xff]
      %v685 = vld [vmem:[%s2 + $0x30] sm:$0xff]
      %v686 = vld [vmem:[%s2 + $0x38] sm:$0xff]
      %v687 = vld [vmem:[%s2 + $0x40] sm:$0xff]
      %v688 = vld [vmem:[%s2 + $0x48] sm:$0xff]
      %v689 = vld [vmem:[%s2 + $0x50] sm:$0xff]
      %v690 = vld [vmem:[%s2 + $0x58] sm:$0xff]
      %v691 = vld [vmem:[%s2 + $0x60] sm:$0xff]
      %v692 = vld [vmem:[%s2 + $0x68] sm:$0xff]
      %v693 = vld [vmem:[%s2 + $0x70] sm:$0xff]
      %v694 = vld [vmem:[%s2 + $0x78] sm:$0xff]
      %696 = vset.pattern.permute.xlu0 0
      %697 = vperm.xlu0 %696, %v679
      %v698 = vpop.permute.xlu0 %697
      %701 = vset.pattern.permute.xlu0 0
      %702 = vperm.xlu0 %701, %v680
      %v703 = vpop.permute.xlu0 %702
      %706 = vset.pattern.permute.xlu0 0
      %707 = vperm.xlu0 %706, %v681
      %v708 = vpop.permute.xlu0 %707
      %711 = vset.pattern.permute.xlu0 0
      %712 = vperm.xlu0 %711, %v682
      %v713 = vpop.permute.xlu0 %712
      %716 = vset.pattern.permute.xlu0 0
      %717 = vperm.xlu0 %716, %v683
      %v718 = vpop.permute.xlu0 %717
      %721 = vset.pattern.permute.xlu0 0
      %722 = vperm.xlu0 %721, %v684
      %v723 = vpop.permute.xlu0 %722
      %726 = vset.pattern.permute.xlu0 0
      %727 = vperm.xlu0 %726, %v685
      %v728 = vpop.permute.xlu0 %727
      %731 = vset.pattern.permute.xlu0 0
      %732 = vperm.xlu0 %731, %v686
      %v733 = vpop.permute.xlu0 %732
      %736 = vset.pattern.permute.xlu0 0
      %737 = vperm.xlu0 %736, %v687
      %v738 = vpop.permute.xlu0 %737
      %741 = vset.pattern.permute.xlu0 0
      %742 = vperm.xlu0 %741, %v688
      %v743 = vpop.permute.xlu0 %742
      %746 = vset.pattern.permute.xlu0 0
      %747 = vperm.xlu0 %746, %v689
      %v748 = vpop.permute.xlu0 %747
      %751 = vset.pattern.permute.xlu0 0
      %752 = vperm.xlu0 %751, %v690
      %v753 = vpop.permute.xlu0 %752
      %756 = vset.pattern.permute.xlu0 0
      %757 = vperm.xlu0 %756, %v691
      %v758 = vpop.permute.xlu0 %757
      %761 = vset.pattern.permute.xlu0 0
      %762 = vperm.xlu0 %761, %v692
      %v763 = vpop.permute.xlu0 %762
      %766 = vset.pattern.permute.xlu0 0
      %767 = vperm.xlu0 %766, %v693
      %v768 = vpop.permute.xlu0 %767
      %771 = vset.pattern.permute.xlu0 0
      %772 = vperm.xlu0 %771, %v694
      %v773 = vpop.permute.xlu0 %772
      %v775 = vadd.f32 %v663, %v698
      %v776 = vadd.f32 %v664, %v703
      %v777 = vadd.f32 %v665, %v708
      %v778 = vadd.f32 %v666, %v713
      %v779 = vadd.f32 %v667, %v718
      %v780 = vadd.f32 %v668, %v723
      %v781 = vadd.f32 %v669, %v728
      %v782 = vadd.f32 %v670, %v733
      %v783 = vadd.f32 %v671, %v738
      %v784 = vadd.f32 %v672, %v743
      %v785 = vadd.f32 %v673, %v748
      %v786 = vadd.f32 %v674, %v753
      %v787 = vadd.f32 %v675, %v758
      %v788 = vadd.f32 %v676, %v763
      %v789 = vadd.f32 %v677, %v768
      %v790 = vadd.f32 %v678, %v773
      %v791 = vmax.f32 %v775, 0.0
      %v792 = vmax.f32 %v776, 0.0
      %v793 = vmax.f32 %v777, 0.0
      %v794 = vmax.f32 %v778, 0.0
      %v795 = vmax.f32 %v779, 0.0
      %v796 = vmax.f32 %v780, 0.0
      %v797 = vmax.f32 %v781, 0.0
      %v798 = vmax.f32 %v782, 0.0
      %v799 = vmax.f32 %v783, 0.0
      %v800 = vmax.f32 %v784, 0.0
      %v801 = vmax.f32 %v785, 0.0
      %v802 = vmax.f32 %v786, 0.0
      %v803 = vmax.f32 %v787, 0.0
      %v804 = vmax.f32 %v788, 0.0
      %v805 = vmax.f32 %v789, 0.0
      %v806 = vmax.f32 %v790, 0.0
      %v807 = vld [vmem:[%s3] sm:$0xf]
      %v808 = vld [vmem:[%s3 + $0x4] sm:$0xf]
      %v809 = vld [vmem:[%s3 + $0x8] sm:$0xf]
      %v810 = vld [vmem:[%s3 + $0xc] sm:$0xf]
      %v811 = vld [vmem:[%s3 + $0x10] sm:$0xf]
      %v812 = vld [vmem:[%s3 + $0x14] sm:$0xf]
      %v813 = vld [vmem:[%s3 + $0x18] sm:$0xf]
      %v814 = vld [vmem:[%s3 + $0x1c] sm:$0xf]
      %v815 = vld [vmem:[%s3 + $0x20] sm:$0xf]
      %v816 = vld [vmem:[%s3 + $0x24] sm:$0xf]
      %v817 = vld [vmem:[%s3 + $0x28] sm:$0xf]
      %v818 = vld [vmem:[%s3 + $0x2c] sm:$0xf]
      %v819 = vld [vmem:[%s3 + $0x30] sm:$0xf]
      %v820 = vld [vmem:[%s3 + $0x34] sm:$0xf]
      %v821 = vld [vmem:[%s3 + $0x38] sm:$0xf]
      %v822 = vld [vmem:[%s3 + $0x3c] sm:$0xf]
      %v823 = vpack.c.bf16 %v792, %v791
      %v824 = vpack.c.bf16 %v794, %v793
      %v825 = vpack.c.bf16 %v796, %v795
      %v826 = vpack.c.bf16 %v798, %v797
      %v827 = vpack.c.bf16 %v800, %v799
      %v828 = vpack.c.bf16 %v802, %v801
      %v829 = vpack.c.bf16 %v804, %v803
      %v830 = vpack.c.bf16 %v806, %v805
      %v831 = vld [vmem:[%s4] sm:$0xff]
      %v832 = vld [vmem:[%s4 + $0x8] sm:$0xff]
      %v833 = vld [vmem:[%s4 + $0x10] sm:$0xff]
      %v834 = vld [vmem:[%s4 + $0x18] sm:$0xff]
      %v835 = vld [vmem:[%s4 + $0x20] sm:$0xff]
      %v836 = vld [vmem:[%s4 + $0x28] sm:$0xff]
      %v837 = vld [vmem:[%s4 + $0x30] sm:$0xff]
      %v838 = vld [vmem:[%s4 + $0x38] sm:$0xff]
      %v839 = vld [vmem:[%s4 + $0x40] sm:$0xff]
      %v840 = vld [vmem:[%s4 + $0x48] sm:$0xff]
      %v841 = vld [vmem:[%s4 + $0x50] sm:$0xff]
      %v842 = vld [vmem:[%s4 + $0x58] sm:$0xff]
      %v843 = vld [vmem:[%s4 + $0x60] sm:$0xff]
      %v844 = vld [vmem:[%s4 + $0x68] sm:$0xff]
      %v845 = vld [vmem:[%s4 + $0x70] sm:$0xff]
      %v846 = vld [vmem:[%s4 + $0x78] sm:$0xff]
      %848 = vset.pattern.permute.xlu0 0
      %849 = vperm.xlu0 %848, %v831
      %v850 = vpop.permute.xlu0 %849
      %853 = vset.pattern.permute.xlu0 0
      %854 = vperm.xlu0 %853, %v832
      %v855 = vpop.permute.xlu0 %854
      %858 = vset.pattern.permute.xlu0 0
      %859 = vperm.xlu0 %858, %v833
      %v860 = vpop.permute.xlu0 %859
      %863 = vset.pattern.permute.xlu0 0
      %864 = vperm.xlu0 %863, %v834
      %v865 = vpop.permute.xlu0 %864
      %868 = vset.pattern.permute.xlu0 0
      %869 = vperm.xlu0 %868, %v835
      %v870 = vpop.permute.xlu0 %869
      %873 = vset.pattern.permute.xlu0 0
      %874 = vperm.xlu0 %873, %v836
      %v875 = vpop.permute.xlu0 %874
      %878 = vset.pattern.permute.xlu0 0
      %879 = vperm.xlu0 %878, %v837
      %v880 = vpop.permute.xlu0 %879
      %883 = vset.pattern.permute.xlu0 0
      %884 = vperm.xlu0 %883, %v838
      %v885 = vpop.permute.xlu0 %884
      %888 = vset.pattern.permute.xlu0 0
      %889 = vperm.xlu0 %888, %v839
      %v890 = vpop.permute.xlu0 %889
      %893 = vset.pattern.permute.xlu0 0
      %894 = vperm.xlu0 %893, %v840
      %v895 = vpop.permute.xlu0 %894
      %898 = vset.pattern.permute.xlu0 0
      %899 = vperm.xlu0 %898, %v841
      %v900 = vpop.permute.xlu0 %899
      %903 = vset.pattern.permute.xlu0 0
      %904 = vperm.xlu0 %903, %v842
      %v905 = vpop.permute.xlu0 %904
      %908 = vset.pattern.permute.xlu0 0
      %909 = vperm.xlu0 %908, %v843
      %v910 = vpop.permute.xlu0 %909
      %913 = vset.pattern.permute.xlu0 0
      %914 = vperm.xlu0 %913, %v844
      %v915 = vpop.permute.xlu0 %914
      %918 = vset.pattern.permute.xlu0 0
      %919 = vperm.xlu0 %918, %v845
      %v920 = vpop.permute.xlu0 %919
      %923 = vset.pattern.permute.xlu0 0
      %924 = vperm.xlu0 %923, %v846
      %v925 = vpop.permute.xlu0 %924
      %v943 = vunpack.c.l.b16 %v807
      %v944 = vunpack.c.l.b16 %v808
      %v945 = vunpack.c.l.b16 %v809
      %v946 = vunpack.c.l.b16 %v810
      %v947 = vunpack.c.l.b16 %v811
      %v948 = vunpack.c.l.b16 %v812
      %v949 = vunpack.c.l.b16 %v813
      %v950 = vunpack.c.l.b16 %v814
      %v951 = vunpack.c.l.b16 %v815
      %v952 = vunpack.c.l.b16 %v816
      %v953 = vunpack.c.l.b16 %v817
      %v954 = vunpack.c.l.b16 %v818
      %v955 = vunpack.c.l.b16 %v819
      %v956 = vunpack.c.l.b16 %v820
      %v957 = vunpack.c.l.b16 %v821
      %v958 = vunpack.c.l.b16 %v822
      %v959 = vpack.c.b16 %v944, %v943
      %v960 = vpack.c.b16 %v946, %v945
      %v961 = vpack.c.b16 %v948, %v947
      %v962 = vpack.c.b16 %v950, %v949
      %v963 = vpack.c.b16 %v952, %v951
      %v964 = vpack.c.b16 %v954, %v953
      %v965 = vpack.c.b16 %v956, %v955
      %v966 = vpack.c.b16 %v958, %v957
      %975 = vmatprep.subr.bf16.mxu0 0
      %976 = vmatpush1.bf16.msra.mxu0 %v823
      %977 = vmatprep.subr.bf16.mxu0 0
      %978 = vmatpush1.bf16.msra.mxu0 %v824
      %979 = vmatprep.subr.bf16.mxu0 0
      %980 = vmatpush1.bf16.msra.mxu0 %v825
      %981 = vmatprep.subr.bf16.mxu0 0
      %982 = vmatpush1.bf16.msra.mxu0 %v826
      %983 = vmatprep.subr.bf16.mxu0 0
      %984 = vmatpush1.bf16.msra.mxu0 %v827
      %985 = vmatprep.subr.bf16.mxu0 0
      %986 = vmatpush1.bf16.msra.mxu0 %v828
      %987 = vmatprep.subr.bf16.mxu0 0
      %988 = vmatpush1.bf16.msra.mxu0 %v829
      %989 = vmatprep.subr.bf16.mxu0 0
      %990 = vmatpush1.bf16.msra.mxu0 %v830
      %991 = vmatprep.subr.bf16.mxu0 0
      %992 = vmatpush1.bf16.msra.mxu0 0
      %993 = vmatprep.subr.bf16.mxu0 0
      %994 = vmatpush1.bf16.msra.mxu0 0
      %995 = vmatprep.subr.bf16.mxu0 0
      %996 = vmatpush1.bf16.msra.mxu0 0
      %997 = vmatprep.subr.bf16.mxu0 0
      %998 = vmatpush1.bf16.msra.mxu0 0
      %999 = vmatprep.subr.bf16.mxu0 0
      %1000 = vmatpush1.bf16.msra.mxu0 0
      %1001 = vmatprep.subr.bf16.mxu0 0
      %1002 = vmatpush1.bf16.msra.mxu0 0
      %1003 = vmatprep.subr.bf16.mxu0 0
      %1004 = vmatpush1.bf16.msra.mxu0 0
      %1005 = vmatprep.subr.bf16.mxu0 0
      %1006 = vmatpush1.bf16.msra.mxu0 0
      %1007 = vmatprep.mubr.bf16.mxu0 0
      %1008 = vmatmul.mubr.bf16.gmra.mrb[0].mxu0 %v959
      %v1009 = vpop.f32.mrb[0].mxu0
      %v1010 = vadd.f32 %v850, %v1009
      %v1011 = vpop.f32.mrb[0].mxu0
      %v1012 = vpop.f32.mrb[0].mxu0
      %v1013 = vadd.f32 %v855, %v1012
      %v1014 = vpop.f32.mrb[0].mxu0
      %1015 = vmatprep.mubr.bf16.mxu0 0
      %1016 = vmatmul.mubr.bf16.gmra.mrb[0].mxu0 %v960
      %v1017 = vpop.f32.mrb[0].mxu0
      %v1018 = vadd.f32 %v860, %v1017
      %v1019 = vpop.f32.mrb[0].mxu0
      %v1020 = vpop.f32.mrb[0].mxu0
      %v1021 = vadd.f32 %v865, %v1020
      %v1022 = vpop.f32.mrb[0].mxu0
      %1023 = vmatprep.mubr.bf16.mxu0 0
      %1024 = vmatmul.mubr.bf16.gmra.mrb[0].mxu0 %v961
      %v1025 = vpop.f32.mrb[0].mxu0
      %v1026 = vadd.f32 %v870, %v1025
      %v1027 = vpop.f32.mrb[0].mxu0
      %v1028 = vpop.f32.mrb[0].mxu0
      %v1029 = vadd.f32 %v875, %v1028
      %v1030 = vpop.f32.mrb[0].mxu0
      %1031 = vmatprep.mubr.bf16.mxu0 0
      %1032 = vmatmul.mubr.bf16.gmra.mrb[0].mxu0 %v962
      %v1033 = vpop.f32.mrb[0].mxu0
      %v1034 = vadd.f32 %v880, %v1033
      %v1035 = vpop.f32.mrb[0].mxu0
      %v1036 = vpop.f32.mrb[0].mxu0
      %v1037 = vadd.f32 %v885, %v1036
      %v1038 = vpop.f32.mrb[0].mxu0
      %1039 = vmatprep.mubr.bf16.mxu0 0
      %1040 = vmatmul.mubr.bf16.gmra.mrb[0].mxu0 %v963
      %v1041 = vpop.f32.mrb[0].mxu0
      %v1042 = vadd.f32 %v890, %v1041
      %v1043 = vpop.f32.mrb[0].mxu0
      %v1044 = vpop.f32.mrb[0].mxu0
      %v1045 = vadd.f32 %v895, %v1044
      %v1046 = vpop.f32.mrb[0].mxu0
      %1047 = vmatprep.mubr.bf16.mxu0 0
      %1048 = vmatmul.mubr.bf16.gmra.mrb[0].mxu0 %v964
      %v1049 = vpop.f32.mrb[0].mxu0
      %v1050 = vadd.f32 %v900, %v1049
      %v1051 = vpop.f32.mrb[0].mxu0
      %v1052 = vpop.f32.mrb[0].mxu0
      %v1053 = vadd.f32 %v905, %v1052
      %v1054 = vpop.f32.mrb[0].mxu0
      %1055 = vmatprep.mubr.bf16.mxu0 0
      %1056 = vmatmul.mubr.bf16.gmra.mrb[0].mxu0 %v965
      %v1057 = vpop.f32.mrb[0].mxu0
      %v1058 = vadd.f32 %v910, %v1057
      %v1059 = vpop.f32.mrb[0].mxu0
      %v1060 = vpop.f32.mrb[0].mxu0
      %v1061 = vadd.f32 %v915, %v1060
      %v1062 = vpop.f32.mrb[0].mxu0
      %1063 = vmatprep.mubr.bf16.mxu0 0
      %1064 = vmatmul.mubr.bf16.gmra.mrb[0].mxu0 %v966
      %v1065 = vpop.f32.mrb[0].mxu0
      %v1066 = vadd.f32 %v920, %v1065
      %v1067 = vpop.f32.mrb[0].mxu0
      %v1068 = vpop.f32.mrb[0].mxu0
      %v1069 = vadd.f32 %v925, %v1068
      %v1070 = vpop.f32.mrb[0].mxu0
      %1071 = vdwg.mxu0
      %v1072 = vmax.f32 %v1010, 0.0
      %v1073 = vmax.f32 %v1013, 0.0
      %v1074 = vmax.f32 %v1018, 0.0
      %v1075 = vmax.f32 %v1021, 0.0
      %v1076 = vmax.f32 %v1026, 0.0
      %v1077 = vmax.f32 %v1029, 0.0
      %v1078 = vmax.f32 %v1034, 0.0
      %v1079 = vmax.f32 %v1037, 0.0
      %v1080 = vmax.f32 %v1042, 0.0
      %v1081 = vmax.f32 %v1045, 0.0
      %v1082 = vmax.f32 %v1050, 0.0
      %v1083 = vmax.f32 %v1053, 0.0
      %v1084 = vmax.f32 %v1058, 0.0
      %v1085 = vmax.f32 %v1061, 0.0
      %v1086 = vmax.f32 %v1066, 0.0
      %v1087 = vmax.f32 %v1069, 0.0
      %v1088 = vld [vmem:[%s5] sm:$0xf]
      %v1089 = vld [vmem:[%s5 + $0x4] sm:$0xf]
      %v1090 = vld [vmem:[%s5 + $0x8] sm:$0xf]
      %v1091 = vld [vmem:[%s5 + $0xc] sm:$0xf]
      %v1092 = vld [vmem:[%s5 + $0x10] sm:$0xf]
      %v1093 = vld [vmem:[%s5 + $0x14] sm:$0xf]
      %v1094 = vld [vmem:[%s5 + $0x18] sm:$0xf]
      %v1095 = vld [vmem:[%s5 + $0x1c] sm:$0xf]
      %v1096 = vld [vmem:[%s5 + $0x20] sm:$0xf]
      %v1097 = vld [vmem:[%s5 + $0x24] sm:$0xf]
      %v1098 = vld [vmem:[%s5 + $0x28] sm:$0xf]
      %v1099 = vld [vmem:[%s5 + $0x2c] sm:$0xf]
      %v1100 = vld [vmem:[%s5 + $0x30] sm:$0xf]
      %v1101 = vld [vmem:[%s5 + $0x34] sm:$0xf]
      %v1102 = vld [vmem:[%s5 + $0x38] sm:$0xf]
      %v1103 = vld [vmem:[%s5 + $0x3c] sm:$0xf]
      %v1104 = vld [vmem:[%s5 + $0x40] sm:$0xf]
      %v1105 = vld [vmem:[%s5 + $0x44] sm:$0xf]
      %v1106 = vld [vmem:[%s5 + $0x48] sm:$0xf]
      %v1107 = vld [vmem:[%s5 + $0x4c] sm:$0xf]
      %v1108 = vld [vmem:[%s5 + $0x50] sm:$0xf]
      %v1109 = vld [vmem:[%s5 + $0x54] sm:$0xf]
      %v1110 = vld [vmem:[%s5 + $0x58] sm:$0xf]
      %v1111 = vld [vmem:[%s5 + $0x5c] sm:$0xf]
      %v1112 = vld [vmem:[%s5 + $0x60] sm:$0xf]
      %v1113 = vld [vmem:[%s5 + $0x64] sm:$0xf]
      %v1114 = vld [vmem:[%s5 + $0x68] sm:$0xf]
      %v1115 = vld [vmem:[%s5 + $0x6c] sm:$0xf]
      %v1116 = vld [vmem:[%s5 + $0x70] sm:$0xf]
      %v1117 = vld [vmem:[%s5 + $0x74] sm:$0xf]
      %v1118 = vld [vmem:[%s5 + $0x78] sm:$0xf]
      %v1119 = vld [vmem:[%s5 + $0x7c] sm:$0xf]
      %v1120 = vpack.c.bf16 %v1073, %v1072
      %v1121 = vpack.c.bf16 %v1075, %v1074
      %v1122 = vpack.c.bf16 %v1077, %v1076
      %v1123 = vpack.c.bf16 %v1079, %v1078
      %v1124 = vpack.c.bf16 %v1081, %v1080
      %v1125 = vpack.c.bf16 %v1083, %v1082
      %v1126 = vpack.c.bf16 %v1085, %v1084
      %v1127 = vpack.c.bf16 %v1087, %v1086
      %v1128 = vld [vmem:[%s6] sm:$0xff]
      %v1129 = vld [vmem:[%s6 + $0x8] sm:$0xff]
      %v1130 = vld [vmem:[%s6 + $0x10] sm:$0xff]
      %v1131 = vld [vmem:[%s6 + $0x18] sm:$0xff]
      %v1132 = vld [vmem:[%s6 + $0x20] sm:$0xff]
      %v1133 = vld [vmem:[%s6 + $0x28] sm:$0xff]
      %v1134 = vld [vmem:[%s6 + $0x30] sm:$0xff]
      %v1135 = vld [vmem:[%s6 + $0x38] sm:$0xff]
      %v1136 = vld [vmem:[%s6 + $0x40] sm:$0xff]
      %v1137 = vld [vmem:[%s6 + $0x48] sm:$0xff]
      %v1138 = vld [vmem:[%s6 + $0x50] sm:$0xff]
      %v1139 = vld [vmem:[%s6 + $0x58] sm:$0xff]
      %v1140 = vld [vmem:[%s6 + $0x60] sm:$0xff]
      %v1141 = vld [vmem:[%s6 + $0x68] sm:$0xff]
      %v1142 = vld [vmem:[%s6 + $0x70] sm:$0xff]
      %v1143 = vld [vmem:[%s6 + $0x78] sm:$0xff]
      %v1144 = vld [vmem:[%s6 + $0x80] sm:$0xff]
      %v1145 = vld [vmem:[%s6 + $0x88] sm:$0xff]
      %v1146 = vld [vmem:[%s6 + $0x90] sm:$0xff]
      %v1147 = vld [vmem:[%s6 + $0x98] sm:$0xff]
      %v1148 = vld [vmem:[%s6 + $0xa0] sm:$0xff]
      %v1149 = vld [vmem:[%s6 + $0xa8] sm:$0xff]
      %v1150 = vld [vmem:[%s6 + $0xb0] sm:$0xff]
      %v1151 = vld [vmem:[%s6 + $0xb8] sm:$0xff]
      %v1152 = vld [vmem:[%s6 + $0xc0] sm:$0xff]
      %v1153 = vld [vmem:[%s6 + $0xc8] sm:$0xff]
      %v1154 = vld [vmem:[%s6 + $0xd0] sm:$0xff]
      %v1155 = vld [vmem:[%s6 + $0xd8] sm:$0xff]
      %v1156 = vld [vmem:[%s6 + $0xe0] sm:$0xff]
      %v1157 = vld [vmem:[%s6 + $0xe8] sm:$0xff]
      %v1158 = vld [vmem:[%s6 + $0xf0] sm:$0xff]
      %v1159 = vld [vmem:[%s6 + $0xf8] sm:$0xff]
      %1161 = vset.pattern.permute.xlu0 0
      %1162 = vperm.xlu0 %1161, %v1128
      %v1163 = vpop.permute.xlu0 %1162
      %1166 = vset.pattern.permute.xlu0 0
      %1167 = vperm.xlu0 %1166, %v1129
      %v1168 = vpop.permute.xlu0 %1167
      %1171 = vset.pattern.permute.xlu0 0
      %1172 = vperm.xlu0 %1171, %v1130
      %v1173 = vpop.permute.xlu0 %1172
      %1176 = vset.pattern.permute.xlu0 0
      %1177 = vperm.xlu0 %1176, %v1131
      %v1178 = vpop.permute.xlu0 %1177
      %1181 = vset.pattern.permute.xlu0 0
      %1182 = vperm.xlu0 %1181, %v1132
      %v1183 = vpop.permute.xlu0 %1182
      %1186 = vset.pattern.permute.xlu0 0
      %1187 = vperm.xlu0 %1186, %v1133
      %v1188 = vpop.permute.xlu0 %1187
      %1191 = vset.pattern.permute.xlu0 0
      %1192 = vperm.xlu0 %1191, %v1134
      %v1193 = vpop.permute.xlu0 %1192
      %1196 = vset.pattern.permute.xlu0 0
      %1197 = vperm.xlu0 %1196, %v1135
      %v1198 = vpop.permute.xlu0 %1197
      %1201 = vset.pattern.permute.xlu0 0
      %1202 = vperm.xlu0 %1201, %v1136
      %v1203 = vpop.permute.xlu0 %1202
      %1206 = vset.pattern.permute.xlu0 0
      %1207 = vperm.xlu0 %1206, %v1137
      %v1208 = vpop.permute.xlu0 %1207
      %1211 = vset.pattern.permute.xlu0 0
      %1212 = vperm.xlu0 %1211, %v1138
      %v1213 = vpop.permute.xlu0 %1212
      %1216 = vset.pattern.permute.xlu0 0
      %1217 = vperm.xlu0 %1216, %v1139
      %v1218 = vpop.permute.xlu0 %1217
      %1221 = vset.pattern.permute.xlu0 0
      %1222 = vperm.xlu0 %1221, %v1140
      %v1223 = vpop.permute.xlu0 %1222
      %1226 = vset.pattern.permute.xlu0 0
      %1227 = vperm.xlu0 %1226, %v1141
      %v1228 = vpop.permute.xlu0 %1227
      %1231 = vset.pattern.permute.xlu0 0
      %1232 = vperm.xlu0 %1231, %v1142
      %v1233 = vpop.permute.xlu0 %1232
      %1236 = vset.pattern.permute.xlu0 0
      %1237 = vperm.xlu0 %1236, %v1143
      %v1238 = vpop.permute.xlu0 %1237
      %1241 = vset.pattern.permute.xlu0 0
      %1242 = vperm.xlu0 %1241, %v1144
      %v1243 = vpop.permute.xlu0 %1242
      %1246 = vset.pattern.permute.xlu0 0
      %1247 = vperm.xlu0 %1246, %v1145
      %v1248 = vpop.permute.xlu0 %1247
      %1251 = vset.pattern.permute.xlu0 0
      %1252 = vperm.xlu0 %1251, %v1146
      %v1253 = vpop.permute.xlu0 %1252
      %1256 = vset.pattern.permute.xlu0 0
      %1257 = vperm.xlu0 %1256, %v1147
      %v1258 = vpop.permute.xlu0 %1257
      %1261 = vset.pattern.permute.xlu0 0
      %1262 = vperm.xlu0 %1261, %v1148
      %v1263 = vpop.permute.xlu0 %1262
      %1266 = vset.pattern.permute.xlu0 0
      %1267 = vperm.xlu0 %1266, %v1149
      %v1268 = vpop.permute.xlu0 %1267
      %1271 = vset.pattern.permute.xlu0 0
      %1272 = vperm.xlu0 %1271, %v1150
      %v1273 = vpop.permute.xlu0 %1272
      %1276 = vset.pattern.permute.xlu0 0
      %1277 = vperm.xlu0 %1276, %v1151
      %v1278 = vpop.permute.xlu0 %1277
      %1281 = vset.pattern.permute.xlu0 0
      %1282 = vperm.xlu0 %1281, %v1152
      %v1283 = vpop.permute.xlu0 %1282
      %1286 = vset.pattern.permute.xlu0 0
      %1287 = vperm.xlu0 %1286, %v1153
      %v1288 = vpop.permute.xlu0 %1287
      %1291 = vset.pattern.permute.xlu0 0
      %1292 = vperm.xlu0 %1291, %v1154
      %v1293 = vpop.permute.xlu0 %1292
      %1296 = vset.pattern.permute.xlu0 0
      %1297 = vperm.xlu0 %1296, %v1155
      %v1298 = vpop.permute.xlu0 %1297
      %1301 = vset.pattern.permute.xlu0 0
      %1302 = vperm.xlu0 %1301, %v1156
      %v1303 = vpop.permute.xlu0 %1302
      %1306 = vset.pattern.permute.xlu0 0
      %1307 = vperm.xlu0 %1306, %v1157
      %v1308 = vpop.permute.xlu0 %1307
      %1311 = vset.pattern.permute.xlu0 0
      %1312 = vperm.xlu0 %1311, %v1158
      %v1313 = vpop.permute.xlu0 %1312
      %1316 = vset.pattern.permute.xlu0 0
      %1317 = vperm.xlu0 %1316, %v1159
      %v1318 = vpop.permute.xlu0 %1317
      %v1352 = vunpack.c.l.b16 %v1088
      %v1353 = vunpack.c.l.b16 %v1089
      %v1354 = vunpack.c.l.b16 %v1090
      %v1355 = vunpack.c.l.b16 %v1091
      %v1356 = vunpack.c.l.b16 %v1092
      %v1357 = vunpack.c.l.b16 %v1093
      %v1358 = vunpack.c.l.b16 %v1094
      %v1359 = vunpack.c.l.b16 %v1095
      %v1360 = vunpack.c.l.b16 %v1096
      %v1361 = vunpack.c.l.b16 %v1097
      %v1362 = vunpack.c.l.b16 %v1098
      %v1363 = vunpack.c.l.b16 %v1099
      %v1364 = vunpack.c.l.b16 %v1100
      %v1365 = vunpack.c.l.b16 %v1101
      %v1366 = vunpack.c.l.b16 %v1102
      %v1367 = vunpack.c.l.b16 %v1103
      %v1368 = vunpack.c.l.b16 %v1104
      %v1369 = vunpack.c.l.b16 %v1105
      %v1370 = vunpack.c.l.b16 %v1106
      %v1371 = vunpack.c.l.b16 %v1107
      %v1372 = vunpack.c.l.b16 %v1108
      %v1373 = vunpack.c.l.b16 %v1109
      %v1374 = vunpack.c.l.b16 %v1110
      %v1375 = vunpack.c.l.b16 %v1111
      %v1376 = vunpack.c.l.b16 %v1112
      %v1377 = vunpack.c.l.b16 %v1113
      %v1378 = vunpack.c.l.b16 %v1114
      %v1379 = vunpack.c.l.b16 %v1115
      %v1380 = vunpack.c.l.b16 %v1116
      %v1381 = vunpack.c.l.b16 %v1117
      %v1382 = vunpack.c.l.b16 %v1118
      %v1383 = vunpack.c.l.b16 %v1119
      %v1384 = vpack.c.b16 %v1353, %v1352
      %v1385 = vpack.c.b16 %v1355, %v1354
      %v1386 = vpack.c.b16 %v1357, %v1356
      %v1387 = vpack.c.b16 %v1359, %v1358
      %v1388 = vpack.c.b16 %v1361, %v1360
      %v1389 = vpack.c.b16 %v1363, %v1362
      %v1390 = vpack.c.b16 %v1365, %v1364
      %v1391 = vpack.c.b16 %v1367, %v1366
      %v1392 = vpack.c.b16 %v1369, %v1368
      %v1393 = vpack.c.b16 %v1371, %v1370
      %v1394 = vpack.c.b16 %v1373, %v1372
      %v1395 = vpack.c.b16 %v1375, %v1374
      %v1396 = vpack.c.b16 %v1377, %v1376
      %v1397 = vpack.c.b16 %v1379, %v1378
      %v1398 = vpack.c.b16 %v1381, %v1380
      %v1399 = vpack.c.b16 %v1383, %v1382
      %1416 = vmatprep.subr.bf16.mxu0 0
      %1417 = vmatpush1.bf16.msra.mxu0 %v1120
      %1418 = vmatprep.subr.bf16.mxu0 0
      %1419 = vmatpush1.bf16.msra.mxu0 %v1121
      %1420 = vmatprep.subr.bf16.mxu0 0
      %1421 = vmatpush1.bf16.msra.mxu0 %v1122
      %1422 = vmatprep.subr.bf16.mxu0 0
      %1423 = vmatpush1.bf16.msra.mxu0 %v1123
      %1424 = vmatprep.subr.bf16.mxu0 0
      %1425 = vmatpush1.bf16.msra.mxu0 %v1124
      %1426 = vmatprep.subr.bf16.mxu0 0
      %1427 = vmatpush1.bf16.msra.mxu0 %v1125
      %1428 = vmatprep.subr.bf16.mxu0 0
      %1429 = vmatpush1.bf16.msra.mxu0 %v1126
      %1430 = vmatprep.subr.bf16.mxu0 0
      %1431 = vmatpush1.bf16.msra.mxu0 %v1127
      %1432 = vmatprep.subr.bf16.mxu0 0
      %1433 = vmatpush1.bf16.msra.mxu0 0
      %1434 = vmatprep.subr.bf16.mxu0 0
      %1435 = vmatpush1.bf16.msra.mxu0 0
      %1436 = vmatprep.subr.bf16.mxu0 0
      %1437 = vmatpush1.bf16.msra.mxu0 0
      %1438 = vmatprep.subr.bf16.mxu0 0
      %1439 = vmatpush1.bf16.msra.mxu0 0
      %1440 = vmatprep.subr.bf16.mxu0 0
      %1441 = vmatpush1.bf16.msra.mxu0 0
      %1442 = vmatprep.subr.bf16.mxu0 0
      %1443 = vmatpush1.bf16.msra.mxu0 0
      %1444 = vmatprep.subr.bf16.mxu0 0
      %1445 = vmatpush1.bf16.msra.mxu0 0
      %1446 = vmatprep.subr.bf16.mxu0 0
      %1447 = vmatpush1.bf16.msra.mxu0 0
      %1448 = vmatprep.mubr.bf16.mxu0 0
      %1449 = vmatmul.mubr.bf16.gmra.mrb[0].mxu0 %v1384
      %v1450 = vpop.f32.mrb[0].mxu0
      %v1451 = vadd.f32 %v1163, %v1450
      %v1452 = vpop.f32.mrb[0].mxu0
      %v1453 = vpop.f32.mrb[0].mxu0
      %v1454 = vadd.f32 %v1168, %v1453
      %v1455 = vpop.f32.mrb[0].mxu0
      %1456 = vmatprep.mubr.bf16.mxu0 0
      %1457 = vmatmul.mubr.bf16.gmra.mrb[0].mxu0 %v1385
      %v1458 = vpop.f32.mrb[0].mxu0
      %v1459 = vadd.f32 %v1173, %v1458
      %v1460 = vpop.f32.mrb[0].mxu0
      %v1461 = vpop.f32.mrb[0].mxu0
      %v1462 = vadd.f32 %v1178, %v1461
      %v1463 = vpop.f32.mrb[0].mxu0
      %1464 = vmatprep.mubr.bf16.mxu0 0
      %1465 = vmatmul.mubr.bf16.gmra.mrb[0].mxu0 %v1386
      %v1466 = vpop.f32.mrb[0].mxu0
      %v1467 = vadd.f32 %v1183, %v1466
      %v1468 = vpop.f32.mrb[0].mxu0
      %v1469 = vpop.f32.mrb[0].mxu0
      %v1470 = vadd.f32 %v1188, %v1469
      %v1471 = vpop.f32.mrb[0].mxu0
      %1472 = vmatprep.mubr.bf16.mxu0 0
      %1473 = vmatmul.mubr.bf16.gmra.mrb[0].mxu0 %v1387
      %v1474 = vpop.f32.mrb[0].mxu0
      %v1475 = vadd.f32 %v1193, %v1474
      %v1476 = vpop.f32.mrb[0].mxu0
      %v1477 = vpop.f32.mrb[0].mxu0
      %v1478 = vadd.f32 %v1198, %v1477
      %v1479 = vpop.f32.mrb[0].mxu0
      %1480 = vmatprep.mubr.bf16.mxu0 0
      %1481 = vmatmul.mubr.bf16.gmra.mrb[0].mxu0 %v1388
      %v1482 = vpop.f32.mrb[0].mxu0
      %v1483 = vadd.f32 %v1203, %v1482
      %v1484 = vpop.f32.mrb[0].mxu0
      %v1485 = vpop.f32.mrb[0].mxu0
      %v1486 = vadd.f32 %v1208, %v1485
      %v1487 = vpop.f32.mrb[0].mxu0
      %1488 = vmatprep.mubr.bf16.mxu0 0
      %1489 = vmatmul.mubr.bf16.gmra.mrb[0].mxu0 %v1389
      %v1490 = vpop.f32.mrb[0].mxu0
      %v1491 = vadd.f32 %v1213, %v1490
      %v1492 = vpop.f32.mrb[0].mxu0
      %v1493 = vpop.f32.mrb[0].mxu0
      %v1494 = vadd.f32 %v1218, %v1493
      %v1495 = vpop.f32.mrb[0].mxu0
      %1496 = vmatprep.mubr.bf16.mxu0 0
      %1497 = vmatmul.mubr.bf16.gmra.mrb[0].mxu0 %v1390
      %v1498 = vpop.f32.mrb[0].mxu0
      %v1499 = vadd.f32 %v1223, %v1498
      %v1500 = vpop.f32.mrb[0].mxu0
      %v1501 = vpop.f32.mrb[0].mxu0
      %v1502 = vadd.f32 %v1228, %v1501
      %v1503 = vpop.f32.mrb[0].mxu0
      %1504 = vmatprep.mubr.bf16.mxu0 0
      %1505 = vmatmul.mubr.bf16.gmra.mrb[0].mxu0 %v1391
      %v1506 = vpop.f32.mrb[0].mxu0
      %v1507 = vadd.f32 %v1233, %v1506
      %v1508 = vpop.f32.mrb[0].mxu0
      %v1509 = vpop.f32.mrb[0].mxu0
      %v1510 = vadd.f32 %v1238, %v1509
      %v1511 = vpop.f32.mrb[0].mxu0
      %1512 = vmatprep.mubr.bf16.mxu0 0
      %1513 = vmatmul.mubr.bf16.gmra.mrb[0].mxu0 %v1392
      %v1514 = vpop.f32.mrb[0].mxu0
      %v1515 = vadd.f32 %v1243, %v1514
      %v1516 = vpop.f32.mrb[0].mxu0
      %v1517 = vpop.f32.mrb[0].mxu0
      %v1518 = vadd.f32 %v1248, %v1517
      %v1519 = vpop.f32.mrb[0].mxu0
      %1520 = vmatprep.mubr.bf16.mxu0 0
      %1521 = vmatmul.mubr.bf16.gmra.mrb[0].mxu0 %v1393
      %v1522 = vpop.f32.mrb[0].mxu0
      %v1523 = vadd.f32 %v1253, %v1522
      %v1524 = vpop.f32.mrb[0].mxu0
      %v1525 = vpop.f32.mrb[0].mxu0
      %v1526 = vadd.f32 %v1258, %v1525
      %v1527 = vpop.f32.mrb[0].mxu0
      %1528 = vmatprep.mubr.bf16.mxu0 0
      %1529 = vmatmul.mubr.bf16.gmra.mrb[0].mxu0 %v1394
      %v1530 = vpop.f32.mrb[0].mxu0
      %v1531 = vadd.f32 %v1263, %v1530
      %v1532 = vpop.f32.mrb[0].mxu0
      %v1533 = vpop.f32.mrb[0].mxu0
      %v1534 = vadd.f32 %v1268, %v1533
      %v1535 = vpop.f32.mrb[0].mxu0
      %1536 = vmatprep.mubr.bf16.mxu0 0
      %1537 = vmatmul.mubr.bf16.gmra.mrb[0].mxu0 %v1395
      %v1538 = vpop.f32.mrb[0].mxu0
      %v1539 = vadd.f32 %v1273, %v1538
      %v1540 = vpop.f32.mrb[0].mxu0
      %v1541 = vpop.f32.mrb[0].mxu0
      %v1542 = vadd.f32 %v1278, %v1541
      %v1543 = vpop.f32.mrb[0].mxu0
      %1544 = vmatprep.mubr.bf16.mxu0 0
      %1545 = vmatmul.mubr.bf16.gmra.mrb[0].mxu0 %v1396
      %v1546 = vpop.f32.mrb[0].mxu0
      %v1547 = vadd.f32 %v1283, %v1546
      %v1548 = vpop.f32.mrb[0].mxu0
      %v1549 = vpop.f32.mrb[0].mxu0
      %v1550 = vadd.f32 %v1288, %v1549
      %v1551 = vpop.f32.mrb[0].mxu0
      %1552 = vmatprep.mubr.bf16.mxu0 0
      %1553 = vmatmul.mubr.bf16.gmra.mrb[0].mxu0 %v1397
      %v1554 = vpop.f32.mrb[0].mxu0
      %v1555 = vadd.f32 %v1293, %v1554
      %v1556 = vpop.f32.mrb[0].mxu0
      %v1557 = vpop.f32.mrb[0].mxu0
      %v1558 = vadd.f32 %v1298, %v1557
      %v1559 = vpop.f32.mrb[0].mxu0
      %1560 = vmatprep.mubr.bf16.mxu0 0
      %1561 = vmatmul.mubr.bf16.gmra.mrb[0].mxu0 %v1398
      %v1562 = vpop.f32.mrb[0].mxu0
      %v1563 = vadd.f32 %v1303, %v1562
      %v1564 = vpop.f32.mrb[0].mxu0
      %v1565 = vpop.f32.mrb[0].mxu0
      %v1566 = vadd.f32 %v1308, %v1565
      %v1567 = vpop.f32.mrb[0].mxu0
      %1568 = vmatprep.mubr.bf16.mxu0 0
      %1569 = vmatmul.mubr.bf16.gmra.mrb[0].mxu0 %v1399
      %v1570 = vpop.f32.mrb[0].mxu0
      %v1571 = vadd.f32 %v1313, %v1570
      %v1572 = vpop.f32.mrb[0].mxu0
      %v1573 = vpop.f32.mrb[0].mxu0
      %v1574 = vadd.f32 %v1318, %v1573
      %v1575 = vpop.f32.mrb[0].mxu0
      %1576 = vdwg.mxu0
      %v1577 = vmax.f32 %v1451, 0.0
      %v1578 = vmax.f32 %v1454, 0.0
      %v1579 = vmax.f32 %v1459, 0.0
      %v1580 = vmax.f32 %v1462, 0.0
      %v1581 = vmax.f32 %v1467, 0.0
      %v1582 = vmax.f32 %v1470, 0.0
      %v1583 = vmax.f32 %v1475, 0.0
      %v1584 = vmax.f32 %v1478, 0.0
      %v1585 = vmax.f32 %v1483, 0.0
      %v1586 = vmax.f32 %v1486, 0.0
      %v1587 = vmax.f32 %v1491, 0.0
      %v1588 = vmax.f32 %v1494, 0.0
      %v1589 = vmax.f32 %v1499, 0.0
      %v1590 = vmax.f32 %v1502, 0.0
      %v1591 = vmax.f32 %v1507, 0.0
      %v1592 = vmax.f32 %v1510, 0.0
      %v1593 = vmax.f32 %v1515, 0.0
      %v1594 = vmax.f32 %v1518, 0.0
      %v1595 = vmax.f32 %v1523, 0.0
      %v1596 = vmax.f32 %v1526, 0.0
      %v1597 = vmax.f32 %v1531, 0.0
      %v1598 = vmax.f32 %v1534, 0.0
      %v1599 = vmax.f32 %v1539, 0.0
      %v1600 = vmax.f32 %v1542, 0.0
      %v1601 = vmax.f32 %v1547, 0.0
      %v1602 = vmax.f32 %v1550, 0.0
      %v1603 = vmax.f32 %v1555, 0.0
      %v1604 = vmax.f32 %v1558, 0.0
      %v1605 = vmax.f32 %v1563, 0.0
      %v1606 = vmax.f32 %v1566, 0.0
      %v1607 = vmax.f32 %v1571, 0.0
      %v1608 = vmax.f32 %v1574, 0.0
      %v1609 = vld [vmem:[%s7] sm:$0xff]
      %v1610 = vld [vmem:[%s7 + $0x8] sm:$0xff]
      %v1611 = vld [vmem:[%s7 + $0x10] sm:$0xff]
      %v1612 = vld [vmem:[%s7 + $0x18] sm:$0xff]
      %v1613 = vld [vmem:[%s7 + $0x20] sm:$0xff]
      %v1614 = vld [vmem:[%s7 + $0x28] sm:$0xff]
      %v1615 = vld [vmem:[%s7 + $0x30] sm:$0xff]
      %v1616 = vld [vmem:[%s7 + $0x38] sm:$0xff]
      %v1617 = vld [vmem:[%s7 + $0x40] sm:$0xff]
      %v1618 = vld [vmem:[%s7 + $0x48] sm:$0xff]
      %v1619 = vld [vmem:[%s7 + $0x50] sm:$0xff]
      %v1620 = vld [vmem:[%s7 + $0x58] sm:$0xff]
      %v1621 = vld [vmem:[%s7 + $0x60] sm:$0xff]
      %v1622 = vld [vmem:[%s7 + $0x68] sm:$0xff]
      %v1623 = vld [vmem:[%s7 + $0x70] sm:$0xff]
      %v1624 = vld [vmem:[%s7 + $0x78] sm:$0xff]
      %v1625 = vpack.c.bf16 %v1578, %v1577
      %v1626 = vpack.c.bf16 %v1580, %v1579
      %v1627 = vpack.c.bf16 %v1582, %v1581
      %v1628 = vpack.c.bf16 %v1584, %v1583
      %v1629 = vpack.c.bf16 %v1586, %v1585
      %v1630 = vpack.c.bf16 %v1588, %v1587
      %v1631 = vpack.c.bf16 %v1590, %v1589
      %v1632 = vpack.c.bf16 %v1592, %v1591
      %v1633 = vpack.c.bf16 %v1594, %v1593
      %v1634 = vpack.c.bf16 %v1596, %v1595
      %v1635 = vpack.c.bf16 %v1598, %v1597
      %v1636 = vpack.c.bf16 %v1600, %v1599
      %v1637 = vpack.c.bf16 %v1602, %v1601
      %v1638 = vpack.c.bf16 %v1604, %v1603
      %v1639 = vpack.c.bf16 %v1606, %v1605
      %v1640 = vpack.c.bf16 %v1608, %v1607
      %v1641 = vld [vmem:[%s8] sm:$0xff]
      %v1642 = vld [vmem:[%s8 + $0x8] sm:$0xff]
      %v1643 = vld [vmem:[%s8 + $0x10] sm:$0xff]
      %v1644 = vld [vmem:[%s8 + $0x18] sm:$0xff]
      %v1645 = vld [vmem:[%s8 + $0x20] sm:$0xff]
      %v1646 = vld [vmem:[%s8 + $0x28] sm:$0xff]
      %v1647 = vld [vmem:[%s8 + $0x30] sm:$0xff]
      %v1648 = vld [vmem:[%s8 + $0x38] sm:$0xff]
      %v1649 = vld [vmem:[%s8 + $0x40] sm:$0xff]
      %v1650 = vld [vmem:[%s8 + $0x48] sm:$0xff]
      %v1651 = vld [vmem:[%s8 + $0x50] sm:$0xff]
      %v1652 = vld [vmem:[%s8 + $0x58] sm:$0xff]
      %v1653 = vld [vmem:[%s8 + $0x60] sm:$0xff]
      %v1654 = vld [vmem:[%s8 + $0x68] sm:$0xff]
      %v1655 = vld [vmem:[%s8 + $0x70] sm:$0xff]
      %v1656 = vld [vmem:[%s8 + $0x78] sm:$0xff]
      %1658 = vset.pattern.permute.xlu0 0
      %1659 = vperm.xlu0 %1658, %v1641
      %v1660 = vpop.permute.xlu0 %1659
      %1663 = vset.pattern.permute.xlu0 0
      %1664 = vperm.xlu0 %1663, %v1642
      %v1665 = vpop.permute.xlu0 %1664
      %1668 = vset.pattern.permute.xlu0 0
      %1669 = vperm.xlu0 %1668, %v1643
      %v1670 = vpop.permute.xlu0 %1669
      %1673 = vset.pattern.permute.xlu0 0
      %1674 = vperm.xlu0 %1673, %v1644
      %v1675 = vpop.permute.xlu0 %1674
      %1678 = vset.pattern.permute.xlu0 0
      %1679 = vperm.xlu0 %1678, %v1645
      %v1680 = vpop.permute.xlu0 %1679
      %1683 = vset.pattern.permute.xlu0 0
      %1684 = vperm.xlu0 %1683, %v1646
      %v1685 = vpop.permute.xlu0 %1684
      %1688 = vset.pattern.permute.xlu0 0
      %1689 = vperm.xlu0 %1688, %v1647
      %v1690 = vpop.permute.xlu0 %1689
      %1693 = vset.pattern.permute.xlu0 0
      %1694 = vperm.xlu0 %1693, %v1648
      %v1695 = vpop.permute.xlu0 %1694
      %1698 = vset.pattern.permute.xlu0 0
      %1699 = vperm.xlu0 %1698, %v1649
      %v1700 = vpop.permute.xlu0 %1699
      %1703 = vset.pattern.permute.xlu0 0
      %1704 = vperm.xlu0 %1703, %v1650
      %v1705 = vpop.permute.xlu0 %1704
      %1708 = vset.pattern.permute.xlu0 0
      %1709 = vperm.xlu0 %1708, %v1651
      %v1710 = vpop.permute.xlu0 %1709
      %1713 = vset.pattern.permute.xlu0 0
      %1714 = vperm.xlu0 %1713, %v1652
      %v1715 = vpop.permute.xlu0 %1714
      %1718 = vset.pattern.permute.xlu0 0
      %1719 = vperm.xlu0 %1718, %v1653
      %v1720 = vpop.permute.xlu0 %1719
      %1723 = vset.pattern.permute.xlu0 0
      %1724 = vperm.xlu0 %1723, %v1654
      %v1725 = vpop.permute.xlu0 %1724
      %1728 = vset.pattern.permute.xlu0 0
      %1729 = vperm.xlu0 %1728, %v1655
      %v1730 = vpop.permute.xlu0 %1729
      %1733 = vset.pattern.permute.xlu0 0
      %1734 = vperm.xlu0 %1733, %v1656
      %v1735 = vpop.permute.xlu0 %1734
      %v1753 = vunpack.c.l.b16 %v1609
      %v1754 = vunpack.c.h.b16 %v1609
      %v1755 = vunpack.c.l.b16 %v1610
      %v1756 = vunpack.c.h.b16 %v1610
      %v1757 = vunpack.c.l.b16 %v1611
      %v1758 = vunpack.c.h.b16 %v1611
      %v1759 = vunpack.c.l.b16 %v1612
      %v1760 = vunpack.c.h.b16 %v1612
      %v1761 = vunpack.c.l.b16 %v1613
      %v1762 = vunpack.c.h.b16 %v1613
      %v1763 = vunpack.c.l.b16 %v1614
      %v1764 = vunpack.c.h.b16 %v1614
      %v1765 = vunpack.c.l.b16 %v1615
      %v1766 = vunpack.c.h.b16 %v1615
      %v1767 = vunpack.c.l.b16 %v1616
      %v1768 = vunpack.c.h.b16 %v1616
      %v1769 = vunpack.c.l.b16 %v1617
      %v1770 = vunpack.c.h.b16 %v1617
      %v1771 = vunpack.c.l.b16 %v1618
      %v1772 = vunpack.c.h.b16 %v1618
      %v1773 = vunpack.c.l.b16 %v1619
      %v1774 = vunpack.c.h.b16 %v1619
      %v1775 = vunpack.c.l.b16 %v1620
      %v1776 = vunpack.c.h.b16 %v1620
      %v1777 = vunpack.c.l.b16 %v1621
      %v1778 = vunpack.c.h.b16 %v1621
      %v1779 = vunpack.c.l.b16 %v1622
      %v1780 = vunpack.c.h.b16 %v1622
      %v1781 = vunpack.c.l.b16 %v1623
      %v1782 = vunpack.c.h.b16 %v1623
      %v1783 = vunpack.c.l.b16 %v1624
      %v1784 = vunpack.c.h.b16 %v1624
      %v1785 = vpack.c.b16 %v1755, %v1753
      %v1786 = vpack.c.b16 %v1756, %v1754
      %v1787 = vpack.c.b16 %v1759, %v1757
      %v1788 = vpack.c.b16 %v1760, %v1758
      %v1789 = vpack.c.b16 %v1763, %v1761
      %v1790 = vpack.c.b16 %v1764, %v1762
      %v1791 = vpack.c.b16 %v1767, %v1765
      %v1792 = vpack.c.b16 %v1768, %v1766
      %v1793 = vpack.c.b16 %v1771, %v1769
      %v1794 = vpack.c.b16 %v1772, %v1770
      %v1795 = vpack.c.b16 %v1775, %v1773
      %v1796 = vpack.c.b16 %v1776, %v1774
      %v1797 = vpack.c.b16 %v1779, %v1777
      %v1798 = vpack.c.b16 %v1780, %v1778
      %v1799 = vpack.c.b16 %v1783, %v1781
      %v1800 = vpack.c.b16 %v1784, %v1782
      %1817 = vmatprep.subr.bf16.mxu0 0
      %1818 = vmatpush1.bf16.msra.mxu0 %v1625
      %1819 = vmatprep.subr.bf16.mxu0 0
      %1820 = vmatpush1.bf16.msra.mxu0 %v1626
      %1821 = vmatprep.subr.bf16.mxu0 0
      %1822 = vmatpush1.bf16.msra.mxu0 %v1627
      %1823 = vmatprep.subr.bf16.mxu0 0
      %1824 = vmatpush1.bf16.msra.mxu0 %v1628
      %1825 = vmatprep.subr.bf16.mxu0 0
      %1826 = vmatpush1.bf16.msra.mxu0 %v1629
      %1827 = vmatprep.subr.bf16.mxu0 0
      %1828 = vmatpush1.bf16.msra.mxu0 %v1630
      %1829 = vmatprep.subr.bf16.mxu0 0
      %1830 = vmatpush1.bf16.msra.mxu0 %v1631
      %1831 = vmatprep.subr.bf16.mxu0 0
      %1832 = vmatpush1.bf16.msra.mxu0 %v1632
      %1833 = vmatprep.subr.bf16.mxu0 0
      %1834 = vmatpush1.bf16.msra.mxu0 %v1633
      %1835 = vmatprep.subr.bf16.mxu0 0
      %1836 = vmatpush1.bf16.msra.mxu0 %v1634
      %1837 = vmatprep.subr.bf16.mxu0 0
      %1838 = vmatpush1.bf16.msra.mxu0 %v1635
      %1839 = vmatprep.subr.bf16.mxu0 0
      %1840 = vmatpush1.bf16.msra.mxu0 %v1636
      %1841 = vmatprep.subr.bf16.mxu0 0
      %1842 = vmatpush1.bf16.msra.mxu0 %v1637
      %1843 = vmatprep.subr.bf16.mxu0 0
      %1844 = vmatpush1.bf16.msra.mxu0 %v1638
      %1845 = vmatprep.subr.bf16.mxu0 0
      %1846 = vmatpush1.bf16.msra.mxu0 %v1639
      %1847 = vmatprep.subr.bf16.mxu0 0
      %1848 = vmatpush1.bf16.msra.mxu0 %v1640
      %1849 = vmatprep.mubr.bf16.mxu0 %v1786
      %1850 = vmatmul.mubr.bf16.gmra.mrb[0].mxu0 %v1785
      %v1851 = vpop.f32.mrb[0].mxu0
      %v1852 = vadd.f32 %v1660, %v1851
      %v1853 = vpop.f32.mrb[0].mxu0
      %v1854 = vpop.f32.mrb[0].mxu0
      %v1855 = vadd.f32 %v1665, %v1854
      %v1856 = vpop.f32.mrb[0].mxu0
      %1857 = vmatprep.mubr.bf16.mxu0 %v1788
      %1858 = vmatmul.mubr.bf16.gmra.mrb[0].mxu0 %v1787
      %v1859 = vpop.f32.mrb[0].mxu0
      %v1860 = vadd.f32 %v1670, %v1859
      %v1861 = vpop.f32.mrb[0].mxu0
      %v1862 = vpop.f32.mrb[0].mxu0
      %v1863 = vadd.f32 %v1675, %v1862
      %v1864 = vpop.f32.mrb[0].mxu0
      %1865 = vmatprep.mubr.bf16.mxu0 %v1790
      %1866 = vmatmul.mubr.bf16.gmra.mrb[0].mxu0 %v1789
      %v1867 = vpop.f32.mrb[0].mxu0
      %v1868 = vadd.f32 %v1680, %v1867
      %v1869 = vpop.f32.mrb[0].mxu0
      %v1870 = vpop.f32.mrb[0].mxu0
      %v1871 = vadd.f32 %v1685, %v1870
      %v1872 = vpop.f32.mrb[0].mxu0
      %1873 = vmatprep.mubr.bf16.mxu0 %v1792
      %1874 = vmatmul.mubr.bf16.gmra.mrb[0].mxu0 %v1791
      %v1875 = vpop.f32.mrb[0].mxu0
      %v1876 = vadd.f32 %v1690, %v1875
      %v1877 = vpop.f32.mrb[0].mxu0
      %v1878 = vpop.f32.mrb[0].mxu0
      %v1879 = vadd.f32 %v1695, %v1878
      %v1880 = vpop.f32.mrb[0].mxu0
      %1881 = vmatprep.mubr.bf16.mxu0 %v1794
      %1882 = vmatmul.mubr.bf16.gmra.mrb[0].mxu0 %v1793
      %v1883 = vpop.f32.mrb[0].mxu0
      %v1884 = vadd.f32 %v1700, %v1883
      %v1885 = vpop.f32.mrb[0].mxu0
      %v1886 = vpop.f32.mrb[0].mxu0
      %v1887 = vadd.f32 %v1705, %v1886
      %v1888 = vpop.f32.mrb[0].mxu0
      %1889 = vmatprep.mubr.bf16.mxu0 %v1796
      %1890 = vmatmul.mubr.bf16.gmra.mrb[0].mxu0 %v1795
      %v1891 = vpop.f32.mrb[0].mxu0
      %v1892 = vadd.f32 %v1710, %v1891
      %v1893 = vpop.f32.mrb[0].mxu0
      %v1894 = vpop.f32.mrb[0].mxu0
      %v1895 = vadd.f32 %v1715, %v1894
      %v1896 = vpop.f32.mrb[0].mxu0
      %1897 = vmatprep.mubr.bf16.mxu0 %v1798
      %1898 = vmatmul.mubr.bf16.gmra.mrb[0].mxu0 %v1797
      %v1899 = vpop.f32.mrb[0].mxu0
      %v1900 = vadd.f32 %v1720, %v1899
      %v1901 = vpop.f32.mrb[0].mxu0
      %v1902 = vpop.f32.mrb[0].mxu0
      %v1903 = vadd.f32 %v1725, %v1902
      %v1904 = vpop.f32.mrb[0].mxu0
      %1905 = vmatprep.mubr.bf16.mxu0 %v1800
      %1906 = vmatmul.mubr.bf16.gmra.mrb[0].mxu0 %v1799
      %v1907 = vpop.f32.mrb[0].mxu0
      %v1908 = vadd.f32 %v1730, %v1907
      %v1909 = vpop.f32.mrb[0].mxu0
      %v1910 = vpop.f32.mrb[0].mxu0
      %v1911 = vadd.f32 %v1735, %v1910
      %v1912 = vpop.f32.mrb[0].mxu0
      %1913 = vdwg.mxu0
      %v1914 = vmax.f32 %v1852, 0.0
      %v1915 = vmax.f32 %v1855, 0.0
      %v1916 = vmax.f32 %v1860, 0.0
      %v1917 = vmax.f32 %v1863, 0.0
      %v1918 = vmax.f32 %v1868, 0.0
      %v1919 = vmax.f32 %v1871, 0.0
      %v1920 = vmax.f32 %v1876, 0.0
      %v1921 = vmax.f32 %v1879, 0.0
      %v1922 = vmax.f32 %v1884, 0.0
      %v1923 = vmax.f32 %v1887, 0.0
      %v1924 = vmax.f32 %v1892, 0.0
      %v1925 = vmax.f32 %v1895, 0.0
      %v1926 = vmax.f32 %v1900, 0.0
      %v1927 = vmax.f32 %v1903, 0.0
      %v1928 = vmax.f32 %v1908, 0.0
      %v1929 = vmax.f32 %v1911, 0.0
      %1930 = vst [vmem:[%s360] sm:$0xff] %v1914
      %1931 = vst [vmem:[%s360 + $0x8] sm:$0xff] %v1915
      %1932 = vst [vmem:[%s360 + $0x10] sm:$0xff] %v1916
      %1933 = vst [vmem:[%s360 + $0x18] sm:$0xff] %v1917
      %1934 = vst [vmem:[%s360 + $0x20] sm:$0xff] %v1918
      %1935 = vst [vmem:[%s360 + $0x28] sm:$0xff] %v1919
      %1936 = vst [vmem:[%s360 + $0x30] sm:$0xff] %v1920
      %1937 = vst [vmem:[%s360 + $0x38] sm:$0xff] %v1921
      %1938 = vst [vmem:[%s360 + $0x40] sm:$0xff] %v1922
      %1939 = vst [vmem:[%s360 + $0x48] sm:$0xff] %v1923
      %1940 = vst [vmem:[%s360 + $0x50] sm:$0xff] %v1924
      %1941 = vst [vmem:[%s360 + $0x58] sm:$0xff] %v1925
      %1942 = vst [vmem:[%s360 + $0x60] sm:$0xff] %v1926
      %1943 = vst [vmem:[%s360 + $0x68] sm:$0xff] %v1927
      %1944 = vst [vmem:[%s360 + $0x70] sm:$0xff] %v1928
      %1945 = vst [vmem:[%s360 + $0x78] sm:$0xff] %v1929
      %p1946 = scmp.lt.s32.totalorder %s24, 1
      %s1947 = scalar_select %p1946, %s24, 1
      %p1948 = scmp.lt.s32.totalorder %s25, 0
      %s1949 = scalar_select %p1948, %s25, 0
      %s1950 = smul.addr %s1947, 16
      %s1951 = sadd.s32 %s1949, %s1950
      %s1952 = smul.addr %s1951, 8
      %s1953 = scalar_lea.vmem %s9, %s1952
      // Predicated region
      $region57: #{model_forward.1} parent=55 // pred_check
        %p1954 = pneg %p248
      $region58: #{model_forward.1} parent=55 // pred_check_branch
        %1956 = sbr.rel (%p1954) target = $region60
      $region59: #{model_forward.1} parent=55 // pred_region
        _
      $region60: #{model_forward.1} parent=55 // pred_fallthru
        _
    $region56: #{model_forward.1} parent=5 // pred_fallthru
      _
    %p1957 = scmp.le.s32.totalorder 2, %s15
    // Predicated region
    $region61: #{model_forward.1} parent=5 // pred_check
      %p1958 = pneg %p1957
    $region62: #{model_forward.1} parent=5 // pred_check_branch
      %1960 = sbr.rel (%p1958) target = $region64
    $region63: #{model_forward.1} parent=5 // pred_region
      %s1961 = ssub.s32 %s15, 2
      // Predicated region
      $region65: #{model_forward.1} parent=63 // pred_check
        %p1962 = pneg %p254
      $region66: #{model_forward.1} parent=63 // pred_check_branch
        %1964 = sbr.rel (%p1962) target = $region68
      $region67: #{model_forward.1} parent=63 // pred_region
        %p1965 = scmp.lt.s32.totalorder %s26, 1
        %s1966 = scalar_select %p1965, %s26, 1
        %p1967 = scmp.lt.s32.totalorder %s27, 0
        %s1968 = scalar_select %p1967, %s27, 0
        %s1969 = smul.addr %s1966, 16
        %s1970 = sadd.s32 %s1968, %s1969
        %s1971 = smul.addr %s1970, 8
        %s1972 = scalar_lea.vmem %s9, %s1971
      $region68: #{model_forward.1} parent=63 // pred_fallthru
        _
    $region64: #{model_forward.1} parent=5 // pred_fallthru
      _
  $region6: #{model_forward.1} parent=0 // loop_footer
    %s19 = sadd.s32 1, %s15
  $region7: #{model_forward.1} parent=0 // loop_footer_branch
    %14 = sbr.rel target = $region3
  $region8: #{model_forward.1} parent=0 // loop_exit
    _

</llo_original>
